<compile_context>
chip_gen: v7x
topology: tpu7x:2x2x1
jax: 0.10.0
libtpu: 0.0.40
codegen_flags: <defaults>
</compile_context>

<pallas_src>
import numpy as np
import jax
import jax.numpy as jnp
from jax.experimental import pallas as pl
from jax.experimental.pallas import tpu as pltpu


_VMEM_SPEC = pl.BlockSpec(memory_space=pltpu.MemorySpace.VMEM)


# ----------------------------------------------------------------------------
# Fused whole-model kernel (single block: all operands live in VMEM)
# ----------------------------------------------------------------------------

def _build_fused_kernel(num_layers):
    """Build a kernel computing the full DEHNN forward for `num_layers`."""

    def kernel(*refs):
        in_refs, o_ref = refs[:-1], refs[-1]
        it = iter(in_refs)

        def nxt():
            return next(it)[...]          # load full operand into vregs

        def dot(a, b):
            return jnp.dot(a, b, preferred_element_type=jnp.float32)

        def mlp(x, w1, b1, w2, b2):
            h = jnp.maximum(dot(x, w1) + b1, 0.0)
            return dot(h, w2) + b2

        node, edge, vn, svn = nxt(), nxt(), nxt(), nxt()
        inc, driver, sink, vn_mat, vn_mat_t = nxt(), nxt(), nxt(), nxt(), nxt()

        for _ in range(num_layers):
            node_mlp1 = (nxt(), nxt(), nxt(), nxt())
            edge_mlp2 = (nxt(), nxt(), nxt(), nxt())
            e3_w1d, e3_w1s, e3_b1, e3_w2, e3_b2 = nxt(), nxt(), nxt(), nxt(), nxt()
            node_to_virtual = (nxt(), nxt(), nxt(), nxt())
            virtual_to_higher = (nxt(), nxt(), nxt(), nxt())
            higher_to_virtual = (nxt(), nxt(), nxt(), nxt())
            virtual_to_node = (nxt(), nxt(), nxt(), nxt())

            # --- node update, part 1: aggregate transformed hyperedges -------
            t_edge = mlp(edge, *node_mlp1)                    # [E, edge_in]
            upd_node = dot(inc, t_edge)                       # [N, edge_in]

            # --- edge update: driver/sink aggregation; concat fused via split W1
            t_node = mlp(node, *edge_mlp2)                    # [N, node_in]
            drv_f = dot(driver, t_node)                       # [E, node_in]
            snk_f = dot(sink, t_node)                         # [E, node_in]
            h = jnp.maximum(dot(drv_f, e3_w1d) + dot(snk_f, e3_w1s) + e3_b1, 0.0)
            upd_edge = dot(h, e3_w2) + e3_b2                  # [E, 2*node_in]

            # --- virtual-node update (+ broadcast transformed super node) ----
            ntv = mlp(node, *node_to_virtual)                 # [N, vn]
            upd_vn = dot(vn_mat, ntv) + mlp(svn, *higher_to_virtual)   # [V, vn]

            # --- super virtual node: XLU row-sum on VMEM-resident data -------
            upd_svn = jnp.sum(mlp(vn, *virtual_to_higher), axis=0, keepdims=True)

            # --- node update, part 2: residual add kept in-register ----------
            vtn = mlp(vn, *virtual_to_node)                   # [V, edge_in]
            upd_node = upd_node + dot(vn_mat_t, vtn)          # [N, edge_in]

            node, edge, vn, svn = upd_node, upd_edge, upd_vn, upd_svn

        out_w1, out_b1, out_w2, out_b2 = nxt(), nxt(), nxt(), nxt()
        o_ref[...] = mlp(edge, out_w1, out_b1, out_w2, out_b2).astype(o_ref.dtype)

    return kernel


# ----------------------------------------------------------------------------
# Wrapper: flatten params/inputs and issue a single pallas_call
# ----------------------------------------------------------------------------

def _flatten_inputs(params, node, edge, vn, super_vn, hg):
    incidence, driver, sink, vn_matrix = hg
    inputs = [node, edge, vn, super_vn.reshape(1, -1),
              incidence, driver, sink, vn_matrix, vn_matrix.T]
    for p in params["layers"]:
        inputs += list(p["node_mlp1"])
        inputs += list(p["edge_mlp2"])
        w1, b1, w2, b2 = p["edge_mlp3"]
        ni = w1.shape[0] // 2
        inputs += [w1[:ni], w1[ni:], b1, w2, b2]   # concat fused via split W1
        inputs += list(p["node_to_virtual_mlp"])
        inputs += list(p["virtual_to_higher_virtual_mlp"])
        inputs += list(p["higher_virtual_to_virtual_mlp"])
        inputs += list(p["virtual_to_node_mlp"])
    inputs += list(params["output_layer"])
    return inputs


def _cost_estimate(params, node, edge, vn, inputs):
    N, E, V = node.shape[0], edge.shape[0], vn.shape[0]
    vn_in = vn.shape[1]
    hidden = params["output_layer"][0].shape[1]
    ni, ei = node.shape[1], edge.shape[1]
    flops = 0

    def mm(m, k, n):
        nonlocal flops
        flops += 2 * m * k * n

    def mlp(m, din, dout):
        mm(m, din, hidden)
        mm(m, hidden, dout)

    for _ in params["layers"]:
        mlp(E, ei, ei); mm(N, E, ei)
        mlp(N, ni, ni); mm(E, N, ni); mm(E, N, ni)
        mlp(E, 2 * ni, 2 * ni)
        mlp(N, ni, vn_in); mm(V, N, vn_in); mlp(1, vn_in, vn_in)
        mlp(V, vn_in, vn_in)
        mlp(V, vn_in, ei); mm(N, V, ei)
        ni, ei = ei, 2 * ni
    mlp(E, ei, 1)

    bytes_accessed = sum(int(np.prod(a.shape)) * a.dtype.itemsize for a in inputs) + E * 4
    return pl.CostEstimate(flops=int(flops), transcendentals=0,
                           bytes_accessed=int(bytes_accessed))


def dehnn_forward(params, node, edge, vn, super_vn, hg):
    num_layers = len(params["layers"])
    inputs = _flatten_inputs(params, node, edge, vn, super_vn, hg)
    E = edge.shape[0]
    out = pl.pallas_call(
        _build_fused_kernel(num_layers),
        out_shape=jax.ShapeDtypeStruct((E, 1), jnp.float32),
        in_specs=[_VMEM_SPEC] * len(inputs),
        out_specs=_VMEM_SPEC,
        cost_estimate=_cost_estimate(params, node, edge, vn, inputs),
    )(*inputs)
    return out[:, 0]


# ----------------------------------------------------------------------------
# Deterministic parameter construction (mirrors nn.Module __init__ shapes)
# ----------------------------------------------------------------------------

def init_mlp(key, din, hidden, dout):
    k1, k2, k3, k4 = jax.random.split(key, 4)
    lim1 = 1.0 / np.sqrt(din)
    lim2 = 1.0 / np.sqrt(hidden)
    w1 = jax.random.uniform(k1, (din, hidden), jnp.float32, -lim1, lim1)
    b1 = jax.random.uniform(k2, (1, hidden), jnp.float32, -lim1, lim1)
    w2 = jax.random.uniform(k3, (hidden, dout), jnp.float32, -lim2, lim2)
    b2 = jax.random.uniform(k4, (1, dout), jnp.float32, -lim2, lim2)
    return (w1, b1, w2, b2)


def init_dehnn(key, num_layers, node_in, edge_in, hidden=24):
    vn_in = node_in                     # matches PyTorch: vn_in fixed at initial node_in
    layers = []
    for _ in range(num_layers):
        key, *ks = jax.random.split(key, 8)
        layer = {
            "node_mlp1": init_mlp(ks[0], edge_in, hidden, edge_in),
            "edge_mlp2": init_mlp(ks[1], node_in, hidden, node_in),
            "edge_mlp3": init_mlp(ks[2], 2 * node_in, hidden, 2 * node_in),
            "node_to_virtual_mlp": init_mlp(ks[3], node_in, hidden, vn_in),
            "virtual_to_higher_virtual_mlp": init_mlp(ks[4], vn_in, hidden, vn_in),
            "higher_virtual_to_virtual_mlp": init_mlp(ks[5], vn_in, hidden, vn_in),
            "virtual_to_node_mlp": init_mlp(ks[6], vn_in, hidden, edge_in),
        }
        layers.append(layer)
        node_in, edge_in = edge_in, node_in
        edge_in *= 2
    key, ko = jax.random.split(key)
    output_layer = init_mlp(ko, edge_in, hidden, 1)
    return {"layers": layers, "output_layer": output_layer}


# ----------------------------------------------------------------------------
# Pure-jnp reference (for the correctness assert)
# ----------------------------------------------------------------------------

def _mlp2_ref(x, w1, b1, w2, b2):
    return jnp.maximum(x @ w1 + b1, 0.0) @ w2 + b2


def dehnn_forward_ref(params, node, edge, vn, super_vn, hg):
    incidence, driver, sink, vn_matrix = hg
    for p in params["layers"]:
        t_edge = _mlp2_ref(edge, *p["node_mlp1"])
        upd_node = incidence @ t_edge
        t_node = _mlp2_ref(node, *p["edge_mlp2"])
        upd_edge = jnp.concatenate([driver @ t_node, sink @ t_node], axis=1)
        upd_edge = _mlp2_ref(upd_edge, *p["edge_mlp3"])
        ntv = _mlp2_ref(node, *p["node_to_virtual_mlp"])
        upd_vn = vn_matrix @ ntv + _mlp2_ref(super_vn[None, :],
                                             *p["higher_virtual_to_virtual_mlp"])
        upd_super = jnp.sum(_mlp2_ref(vn, *p["virtual_to_higher_virtual_mlp"]), axis=0)
        vtn = _mlp2_ref(vn, *p["virtual_to_node_mlp"])
        upd_node = upd_node + vn_matrix.T @ vtn
        node, edge, vn, super_vn = upd_node, upd_edge, upd_vn, upd_super
    return _mlp2_ref(edge, *params["output_layer"])[:, 0]


# ----------------------------------------------------------------------------
# Main
# ----------------------------------------------------------------------------

if __name__ == "__main__":
    key = jax.random.PRNGKey(0)

    # Small shapes: N nodes, E hyperedges, V virtual nodes.
    N, E, V = 12, 10, 4
    NODE_IN, EDGE_IN, HIDDEN = 8, 6, 24
    NUM_LAYERS = 2

    k_param, k_node, k_edge, k_vn, k_svn, k_inc, k_drv, k_snk, k_vnm = \
        jax.random.split(key, 9)

    params = init_dehnn(k_param, NUM_LAYERS, NODE_IN, EDGE_IN, HIDDEN)

    node_features = jax.random.normal(k_node, (N, NODE_IN), jnp.float32)
    edge_features = jax.random.normal(k_edge, (E, EDGE_IN), jnp.float32)
    vn_features = jax.random.normal(k_vn, (V, NODE_IN), jnp.float32)
    super_vn_features = jax.random.normal(k_svn, (NODE_IN,), jnp.float32)

    # Synthetic hypergraph connectivity (dense 0/1 matrices).
    incidence = (jax.random.uniform(k_inc, (N, E)) < 0.3).astype(jnp.float32)
    driver = (jax.random.uniform(k_drv, (E, N)) < 0.2).astype(jnp.float32)
    sink = (jax.random.uniform(k_snk, (E, N)) < 0.2).astype(jnp.float32)
    vn_matrix = (jax.random.uniform(k_vnm, (V, N)) < 0.4).astype(jnp.float32)
    hypergraph = (incidence, driver, sink, vn_matrix)

    fwd = jax.jit(dehnn_forward)
    out = fwd(params, node_features, edge_features, vn_features,
              super_vn_features, hypergraph)
    out = jax.block_until_ready(out)

    ref = dehnn_forward_ref(params, node_features, edge_features, vn_features,
                            super_vn_features, hypergraph)
    np.testing.assert_allclose(np.asarray(out), np.asarray(ref),
                               rtol=1e-4, atol=1e-4)

    print("KERNEL_OK")
</pallas_src>

<mosaic_0001>
module attributes {stable_mosaic.version = 11 : i64} {
  func.func @kernel(%arg0: memref<12x8xf32, #tpu.memory_space<vmem>>, %arg1: memref<10x6xf32, #tpu.memory_space<vmem>>, %arg2: memref<4x8xf32, #tpu.memory_space<vmem>>, %arg3: memref<1x8xf32, #tpu.memory_space<vmem>>, %arg4: memref<12x10xf32, #tpu.memory_space<vmem>>, %arg5: memref<10x12xf32, #tpu.memory_space<vmem>>, %arg6: memref<10x12xf32, #tpu.memory_space<vmem>>, %arg7: memref<4x12xf32, #tpu.memory_space<vmem>>, %arg8: memref<12x4xf32, #tpu.memory_space<vmem>>, %arg9: memref<6x24xf32, #tpu.memory_space<vmem>>, %arg10: memref<1x24xf32, #tpu.memory_space<vmem>>, %arg11: memref<24x6xf32, #tpu.memory_space<vmem>>, %arg12: memref<1x6xf32, #tpu.memory_space<vmem>>, %arg13: memref<8x24xf32, #tpu.memory_space<vmem>>, %arg14: memref<1x24xf32, #tpu.memory_space<vmem>>, %arg15: memref<24x8xf32, #tpu.memory_space<vmem>>, %arg16: memref<1x8xf32, #tpu.memory_space<vmem>>, %arg17: memref<8x24xf32, #tpu.memory_space<vmem>>, %arg18: memref<8x24xf32, #tpu.memory_space<vmem>>, %arg19: memref<1x24xf32, #tpu.memory_space<vmem>>, %arg20: memref<24x16xf32, #tpu.memory_space<vmem>>, %arg21: memref<1x16xf32, #tpu.memory_space<vmem>>, %arg22: memref<8x24xf32, #tpu.memory_space<vmem>>, %arg23: memref<1x24xf32, #tpu.memory_space<vmem>>, %arg24: memref<24x8xf32, #tpu.memory_space<vmem>>, %arg25: memref<1x8xf32, #tpu.memory_space<vmem>>, %arg26: memref<8x24xf32, #tpu.memory_space<vmem>>, %arg27: memref<1x24xf32, #tpu.memory_space<vmem>>, %arg28: memref<24x8xf32, #tpu.memory_space<vmem>>, %arg29: memref<1x8xf32, #tpu.memory_space<vmem>>, %arg30: memref<8x24xf32, #tpu.memory_space<vmem>>, %arg31: memref<1x24xf32, #tpu.memory_space<vmem>>, %arg32: memref<24x8xf32, #tpu.memory_space<vmem>>, %arg33: memref<1x8xf32, #tpu.memory_space<vmem>>, %arg34: memref<8x24xf32, #tpu.memory_space<vmem>>, %arg35: memref<1x24xf32, #tpu.memory_space<vmem>>, %arg36: memref<24x6xf32, #tpu.memory_space<vmem>>, %arg37: memref<1x6xf32, #tpu.memory_space<vmem>>, %arg38: memref<16x24xf32, #tpu.memory_space<vmem>>, %arg39: memref<1x24xf32, #tpu.memory_space<vmem>>, %arg40: memref<24x16xf32, #tpu.memory_space<vmem>>, %arg41: memref<1x16xf32, #tpu.memory_space<vmem>>, %arg42: memref<6x24xf32, #tpu.memory_space<vmem>>, %arg43: memref<1x24xf32, #tpu.memory_space<vmem>>, %arg44: memref<24x6xf32, #tpu.memory_space<vmem>>, %arg45: memref<1x6xf32, #tpu.memory_space<vmem>>, %arg46: memref<6x24xf32, #tpu.memory_space<vmem>>, %arg47: memref<6x24xf32, #tpu.memory_space<vmem>>, %arg48: memref<1x24xf32, #tpu.memory_space<vmem>>, %arg49: memref<24x12xf32, #tpu.memory_space<vmem>>, %arg50: memref<1x12xf32, #tpu.memory_space<vmem>>, %arg51: memref<6x24xf32, #tpu.memory_space<vmem>>, %arg52: memref<1x24xf32, #tpu.memory_space<vmem>>, %arg53: memref<24x8xf32, #tpu.memory_space<vmem>>, %arg54: memref<1x8xf32, #tpu.memory_space<vmem>>, %arg55: memref<8x24xf32, #tpu.memory_space<vmem>>, %arg56: memref<1x24xf32, #tpu.memory_space<vmem>>, %arg57: memref<24x8xf32, #tpu.memory_space<vmem>>, %arg58: memref<1x8xf32, #tpu.memory_space<vmem>>, %arg59: memref<8x24xf32, #tpu.memory_space<vmem>>, %arg60: memref<1x24xf32, #tpu.memory_space<vmem>>, %arg61: memref<24x8xf32, #tpu.memory_space<vmem>>, %arg62: memref<1x8xf32, #tpu.memory_space<vmem>>, %arg63: memref<8x24xf32, #tpu.memory_space<vmem>>, %arg64: memref<1x24xf32, #tpu.memory_space<vmem>>, %arg65: memref<24x16xf32, #tpu.memory_space<vmem>>, %arg66: memref<1x16xf32, #tpu.memory_space<vmem>>, %arg67: memref<12x24xf32, #tpu.memory_space<vmem>>, %arg68: memref<1x24xf32, #tpu.memory_space<vmem>>, %arg69: memref<24x1xf32, #tpu.memory_space<vmem>>, %arg70: memref<1x1xf32, #tpu.memory_space<vmem>>, %arg71: memref<10x1xf32, #tpu.memory_space<vmem>>) attributes {dimension_semantics = [], scalar_prefetch = 0 : i64, scratch_operands = 0 : i64, tpu.core_type = #tpu.core_type<tc>} {
    %c0 = arith.constant 0 : index
    %c0_0 = arith.constant 0 : index
    %0 = vector.load %arg1[%c0, %c0_0] : memref<10x6xf32, #tpu.memory_space<vmem>>, vector<10x6xf32>
    %c0_1 = arith.constant 0 : index
    %c0_2 = arith.constant 0 : index
    %1 = vector.load %arg2[%c0_1, %c0_2] : memref<4x8xf32, #tpu.memory_space<vmem>>, vector<4x8xf32>
    %c0_3 = arith.constant 0 : index
    %c0_4 = arith.constant 0 : index
    %2 = vector.load %arg4[%c0_3, %c0_4] : memref<12x10xf32, #tpu.memory_space<vmem>>, vector<12x10xf32>
    %c0_5 = arith.constant 0 : index
    %c0_6 = arith.constant 0 : index
    %3 = vector.load %arg5[%c0_5, %c0_6] : memref<10x12xf32, #tpu.memory_space<vmem>>, vector<10x12xf32>
    %c0_7 = arith.constant 0 : index
    %c0_8 = arith.constant 0 : index
    %4 = vector.load %arg6[%c0_7, %c0_8] : memref<10x12xf32, #tpu.memory_space<vmem>>, vector<10x12xf32>
    %c0_9 = arith.constant 0 : index
    %c0_10 = arith.constant 0 : index
    %5 = vector.load %arg8[%c0_9, %c0_10] : memref<12x4xf32, #tpu.memory_space<vmem>>, vector<12x4xf32>
    %c0_11 = arith.constant 0 : index
    %c0_12 = arith.constant 0 : index
    %6 = vector.load %arg9[%c0_11, %c0_12] : memref<6x24xf32, #tpu.memory_space<vmem>>, vector<6x24xf32>
    %c0_13 = arith.constant 0 : index
    %c0_14 = arith.constant 0 : index
    %7 = vector.load %arg10[%c0_13, %c0_14] : memref<1x24xf32, #tpu.memory_space<vmem>>, vector<1x24xf32>
    %c0_15 = arith.constant 0 : index
    %c0_16 = arith.constant 0 : index
    %8 = vector.load %arg11[%c0_15, %c0_16] : memref<24x6xf32, #tpu.memory_space<vmem>>, vector<24x6xf32>
    %c0_17 = arith.constant 0 : index
    %c0_18 = arith.constant 0 : index
    %9 = vector.load %arg12[%c0_17, %c0_18] : memref<1x6xf32, #tpu.memory_space<vmem>>, vector<1x6xf32>
    %c0_19 = arith.constant 0 : index
    %c0_20 = arith.constant 0 : index
    %10 = vector.load %arg34[%c0_19, %c0_20] : memref<8x24xf32, #tpu.memory_space<vmem>>, vector<8x24xf32>
    %c0_21 = arith.constant 0 : index
    %c0_22 = arith.constant 0 : index
    %11 = vector.load %arg35[%c0_21, %c0_22] : memref<1x24xf32, #tpu.memory_space<vmem>>, vector<1x24xf32>
    %c0_23 = arith.constant 0 : index
    %c0_24 = arith.constant 0 : index
    %12 = vector.load %arg36[%c0_23, %c0_24] : memref<24x6xf32, #tpu.memory_space<vmem>>, vector<24x6xf32>
    %c0_25 = arith.constant 0 : index
    %c0_26 = arith.constant 0 : index
    %13 = vector.load %arg37[%c0_25, %c0_26] : memref<1x6xf32, #tpu.memory_space<vmem>>, vector<1x6xf32>
    %cst = arith.constant dense<0.000000e+00> : vector<10x24xf32>
    %14 = tpu.matmul %0, %6, %cst {dimension_numbers = #tpu.dot_dimension_numbers<[1], [0], [0], [1], [0, 0, 1, 1], [], []>} : vector<10x6xf32>, vector<6x24xf32>, vector<10x24xf32> -> vector<10x24xf32>
    %15 = vector.broadcast %7 : vector<1x24xf32> to vector<10x24xf32>
    %16 = arith.addf %14, %15 : vector<10x24xf32>
    %cst_27 = arith.constant 0.000000e+00 : f32
    %17 = vector.broadcast %cst_27 : f32 to vector<10x24xf32>
    %18 = arith.maximumf %16, %17 : vector<10x24xf32>
    %cst_28 = arith.constant dense<0.000000e+00> : vector<10x6xf32>
    %19 = tpu.matmul %18, %8, %cst_28 {dimension_numbers = #tpu.dot_dimension_numbers<[1], [0], [0], [1], [0, 0, 1, 1], [], []>} : vector<10x24xf32>, vector<24x6xf32>, vector<10x6xf32> -> vector<10x6xf32>
    %20 = vector.broadcast %9 : vector<1x6xf32> to vector<10x6xf32>
    %21 = arith.addf %19, %20 : vector<10x6xf32>
    %cst_29 = arith.constant dense<0.000000e+00> : vector<12x6xf32>
    %22 = tpu.matmul %2, %21, %cst_29 {dimension_numbers = #tpu.dot_dimension_numbers<[1], [0], [0], [1], [0, 0, 1, 1], [], []>} : vector<12x10xf32>, vector<10x6xf32>, vector<12x6xf32> -> vector<12x6xf32>
    %cst_30 = arith.constant dense<0.000000e+00> : vector<4x24xf32>
    %23 = tpu.matmul %1, %10, %cst_30 {dimension_numbers = #tpu.dot_dimension_numbers<[1], [0], [0], [1], [0, 0, 1, 1], [], []>} : vector<4x8xf32>, vector<8x24xf32>, vector<4x24xf32> -> vector<4x24xf32>
    %24 = vector.broadcast %11 : vector<1x24xf32> to vector<4x24xf32>
    %25 = arith.addf %23, %24 : vector<4x24xf32>
    %cst_31 = arith.constant 0.000000e+00 : f32
    %26 = vector.broadcast %cst_31 : f32 to vector<4x24xf32>
    %27 = arith.maximumf %25, %26 : vector<4x24xf32>
    %cst_32 = arith.constant dense<0.000000e+00> : vector<4x6xf32>
    %28 = tpu.matmul %27, %12, %cst_32 {dimension_numbers = #tpu.dot_dimension_numbers<[1], [0], [0], [1], [0, 0, 1, 1], [], []>} : vector<4x24xf32>, vector<24x6xf32>, vector<4x6xf32> -> vector<4x6xf32>
    %29 = vector.broadcast %13 : vector<1x6xf32> to vector<4x6xf32>
    %30 = arith.addf %28, %29 : vector<4x6xf32>
    %cst_33 = arith.constant dense<0.000000e+00> : vector<12x6xf32>
    %31 = tpu.matmul %5, %30, %cst_33 {dimension_numbers = #tpu.dot_dimension_numbers<[1], [0], [0], [1], [0, 0, 1, 1], [], []>} : vector<12x4xf32>, vector<4x6xf32>, vector<12x6xf32> -> vector<12x6xf32>
    %32 = arith.addf %22, %31 : vector<12x6xf32>
    %c0_34 = arith.constant 0 : index
    %c0_35 = arith.constant 0 : index
    %33 = vector.load %arg42[%c0_34, %c0_35] : memref<6x24xf32, #tpu.memory_space<vmem>>, vector<6x24xf32>
    %c0_36 = arith.constant 0 : index
    %c0_37 = arith.constant 0 : index
    %34 = vector.load %arg43[%c0_36, %c0_37] : memref<1x24xf32, #tpu.memory_space<vmem>>, vector<1x24xf32>
    %c0_38 = arith.constant 0 : index
    %c0_39 = arith.constant 0 : index
    %35 = vector.load %arg44[%c0_38, %c0_39] : memref<24x6xf32, #tpu.memory_space<vmem>>, vector<24x6xf32>
    %c0_40 = arith.constant 0 : index
    %c0_41 = arith.constant 0 : index
    %36 = vector.load %arg45[%c0_40, %c0_41] : memref<1x6xf32, #tpu.memory_space<vmem>>, vector<1x6xf32>
    %c0_42 = arith.constant 0 : index
    %c0_43 = arith.constant 0 : index
    %37 = vector.load %arg46[%c0_42, %c0_43] : memref<6x24xf32, #tpu.memory_space<vmem>>, vector<6x24xf32>
    %c0_44 = arith.constant 0 : index
    %c0_45 = arith.constant 0 : index
    %38 = vector.load %arg47[%c0_44, %c0_45] : memref<6x24xf32, #tpu.memory_space<vmem>>, vector<6x24xf32>
    %c0_46 = arith.constant 0 : index
    %c0_47 = arith.constant 0 : index
    %39 = vector.load %arg48[%c0_46, %c0_47] : memref<1x24xf32, #tpu.memory_space<vmem>>, vector<1x24xf32>
    %c0_48 = arith.constant 0 : index
    %c0_49 = arith.constant 0 : index
    %40 = vector.load %arg49[%c0_48, %c0_49] : memref<24x12xf32, #tpu.memory_space<vmem>>, vector<24x12xf32>
    %c0_50 = arith.constant 0 : index
    %c0_51 = arith.constant 0 : index
    %41 = vector.load %arg50[%c0_50, %c0_51] : memref<1x12xf32, #tpu.memory_space<vmem>>, vector<1x12xf32>
    %cst_52 = arith.constant dense<0.000000e+00> : vector<12x24xf32>
    %42 = tpu.matmul %32, %33, %cst_52 {dimension_numbers = #tpu.dot_dimension_numbers<[1], [0], [0], [1], [0, 0, 1, 1], [], []>} : vector<12x6xf32>, vector<6x24xf32>, vector<12x24xf32> -> vector<12x24xf32>
    %43 = vector.broadcast %34 : vector<1x24xf32> to vector<12x24xf32>
    %44 = arith.addf %42, %43 : vector<12x24xf32>
    %cst_53 = arith.constant 0.000000e+00 : f32
    %45 = vector.broadcast %cst_53 : f32 to vector<12x24xf32>
    %46 = arith.maximumf %44, %45 : vector<12x24xf32>
    %cst_54 = arith.constant dense<0.000000e+00> : vector<12x6xf32>
    %47 = tpu.matmul %46, %35, %cst_54 {dimension_numbers = #tpu.dot_dimension_numbers<[1], [0], [0], [1], [0, 0, 1, 1], [], []>} : vector<12x24xf32>, vector<24x6xf32>, vector<12x6xf32> -> vector<12x6xf32>
    %48 = vector.broadcast %36 : vector<1x6xf32> to vector<12x6xf32>
    %49 = arith.addf %47, %48 : vector<12x6xf32>
    %cst_55 = arith.constant dense<0.000000e+00> : vector<10x6xf32>
    %50 = tpu.matmul %3, %49, %cst_55 {dimension_numbers = #tpu.dot_dimension_numbers<[1], [0], [0], [1], [0, 0, 1, 1], [], []>} : vector<10x12xf32>, vector<12x6xf32>, vector<10x6xf32> -> vector<10x6xf32>
    %cst_56 = arith.constant dense<0.000000e+00> : vector<10x6xf32>
    %51 = tpu.matmul %4, %49, %cst_56 {dimension_numbers = #tpu.dot_dimension_numbers<[1], [0], [0], [1], [0, 0, 1, 1], [], []>} : vector<10x12xf32>, vector<12x6xf32>, vector<10x6xf32> -> vector<10x6xf32>
    %cst_57 = arith.constant dense<0.000000e+00> : vector<10x24xf32>
    %52 = tpu.matmul %50, %37, %cst_57 {dimension_numbers = #tpu.dot_dimension_numbers<[1], [0], [0], [1], [0, 0, 1, 1], [], []>} : vector<10x6xf32>, vector<6x24xf32>, vector<10x24xf32> -> vector<10x24xf32>
    %cst_58 = arith.constant dense<0.000000e+00> : vector<10x24xf32>
    %53 = tpu.matmul %51, %38, %cst_58 {dimension_numbers = #tpu.dot_dimension_numbers<[1], [0], [0], [1], [0, 0, 1, 1], [], []>} : vector<10x6xf32>, vector<6x24xf32>, vector<10x24xf32> -> vector<10x24xf32>
    %54 = arith.addf %52, %53 : vector<10x24xf32>
    %55 = vector.broadcast %39 : vector<1x24xf32> to vector<10x24xf32>
    %56 = arith.addf %54, %55 : vector<10x24xf32>
    %cst_59 = arith.constant 0.000000e+00 : f32
    %57 = vector.broadcast %cst_59 : f32 to vector<10x24xf32>
    %58 = arith.maximumf %56, %57 : vector<10x24xf32>
    %cst_60 = arith.constant dense<0.000000e+00> : vector<10x12xf32>
    %59 = tpu.matmul %58, %40, %cst_60 {dimension_numbers = #tpu.dot_dimension_numbers<[1], [0], [0], [1], [0, 0, 1, 1], [], []>} : vector<10x24xf32>, vector<24x12xf32>, vector<10x12xf32> -> vector<10x12xf32>
    %60 = vector.broadcast %41 : vector<1x12xf32> to vector<10x12xf32>
    %61 = arith.addf %59, %60 : vector<10x12xf32>
    %c0_61 = arith.constant 0 : index
    %c0_62 = arith.constant 0 : index
    %62 = vector.load %arg67[%c0_61, %c0_62] : memref<12x24xf32, #tpu.memory_space<vmem>>, vector<12x24xf32>
    %c0_63 = arith.constant 0 : index
    %c0_64 = arith.constant 0 : index
    %63 = vector.load %arg68[%c0_63, %c0_64] : memref<1x24xf32, #tpu.memory_space<vmem>>, vector<1x24xf32>
    %c0_65 = arith.constant 0 : index
    %c0_66 = arith.constant 0 : index
    %64 = vector.load %arg69[%c0_65, %c0_66] : memref<24x1xf32, #tpu.memory_space<vmem>>, vector<24x1xf32>
    %c0_67 = arith.constant 0 : index
    %c0_68 = arith.constant 0 : index
    %65 = vector.load %arg70[%c0_67, %c0_68] : memref<1x1xf32, #tpu.memory_space<vmem>>, vector<1x1xf32>
    %cst_69 = arith.constant dense<0.000000e+00> : vector<10x24xf32>
    %66 = tpu.matmul %61, %62, %cst_69 {dimension_numbers = #tpu.dot_dimension_numbers<[1], [0], [0], [1], [0, 0, 1, 1], [], []>} : vector<10x12xf32>, vector<12x24xf32>, vector<10x24xf32> -> vector<10x24xf32>
    %67 = vector.broadcast %63 : vector<1x24xf32> to vector<10x24xf32>
    %68 = arith.addf %66, %67 : vector<10x24xf32>
    %cst_70 = arith.constant 0.000000e+00 : f32
    %69 = vector.broadcast %cst_70 : f32 to vector<10x24xf32>
    %70 = arith.maximumf %68, %69 : vector<10x24xf32>
    %cst_71 = arith.constant dense<0.000000e+00> : vector<10x1xf32>
    %71 = tpu.matmul %70, %64, %cst_71 {dimension_numbers = #tpu.dot_dimension_numbers<[1], [0], [0], [1], [0, 0, 1, 1], [], []>} : vector<10x24xf32>, vector<24x1xf32>, vector<10x1xf32> -> vector<10x1xf32>
    %72 = vector.broadcast %65 : vector<1x1xf32> to vector<10x1xf32>
    %73 = arith.addf %71, %72 : vector<10x1xf32>
    %c0_72 = arith.constant 0 : index
    %c0_73 = arith.constant 0 : index
    %74 = vector.load %arg71[%c0_72, %c0_73] : memref<10x1xf32, #tpu.memory_space<vmem>>, vector<10x1xf32>
    tpu.vector_store %arg71[%c0_72, %c0_73], %73 {strides = array<i32>} : memref<10x1xf32, #tpu.memory_space<vmem>>, vector<10x1xf32>,
    return
  }
}

</mosaic_0001>

<llo_original>
// kernel: dehnn_forward.1
$region0: #{dehnn_forward.1}
  #allocation0 [shape = 'u32[]', space=smem, size = 0x4, offset = 0x4, fixed_abs, tag = 'smem constant byte address 0x4 - core index']
  #allocation1 [shape = 'u32[144,128]{1,0:T(1,128)}', space=vmem, size = 0x12000, scoped, tag = 'internal scratch']
  #allocation2 [shape = 'f32[1,1]{1,0:T(1,128)S(1)}', space=vmem, size = 0x200, scoped, tag = 'scoped memory for dehnn_forward.1']
  %s0 = inlined_call_operand.smem [shape: u32[72], index: -1, kind: input, shape index: {}]
  %s1 = sld [smem:[%s0]]
  %s2 = scalar_lea.smem %s0, 1
  %s3 = sld [smem:[%s2]]
  %s4 = scalar_lea.smem %s0, 2
  %s5 = sld [smem:[%s4]]
  %s6 = scalar_lea.smem %s0, 3
  %s7 = sld [smem:[%s6]]
  %s8 = scalar_lea.smem %s0, 4
  %s9 = sld [smem:[%s8]]
  %s10 = scalar_lea.smem %s0, 5
  %s11 = sld [smem:[%s10]]
  %s12 = scalar_lea.smem %s0, 6
  %s13 = sld [smem:[%s12]]
  %s14 = scalar_lea.smem %s0, 7
  %s15 = sld [smem:[%s14]]
  %s16 = scalar_lea.smem %s0, 8
  %s17 = sld [smem:[%s16]]
  %s18 = scalar_lea.smem %s0, 9
  %s19 = sld [smem:[%s18]]
  %s20 = scalar_lea.smem %s0, 10
  %s21 = sld [smem:[%s20]]
  %s22 = scalar_lea.smem %s0, 11
  %s23 = sld [smem:[%s22]]
  %s24 = scalar_lea.smem %s0, 12
  %s25 = sld [smem:[%s24]]
  %s26 = scalar_lea.smem %s0, 13
  %s27 = sld [smem:[%s26]]
  %s28 = scalar_lea.smem %s0, 14
  %s29 = sld [smem:[%s28]]
  %s30 = scalar_lea.smem %s0, 15
  %s31 = sld [smem:[%s30]]
  %s32 = scalar_lea.smem %s0, 16
  %s33 = sld [smem:[%s32]]
  %s34 = scalar_lea.smem %s0, 17
  %s35 = sld [smem:[%s34]]
  %s36 = scalar_lea.smem %s0, 18
  %s37 = sld [smem:[%s36]]
  %s38 = scalar_lea.smem %s0, 19
  %s39 = sld [smem:[%s38]]
  %s40 = scalar_lea.smem %s0, 20
  %s41 = sld [smem:[%s40]]
  %s42 = scalar_lea.smem %s0, 21
  %s43 = sld [smem:[%s42]]
  %s44 = scalar_lea.smem %s0, 22
  %s45 = sld [smem:[%s44]]
  %s46 = scalar_lea.smem %s0, 23
  %s47 = sld [smem:[%s46]]
  %s48 = scalar_lea.smem %s0, 24
  %s49 = sld [smem:[%s48]]
  %s50 = scalar_lea.smem %s0, 25
  %s51 = sld [smem:[%s50]]
  %s52 = scalar_lea.smem %s0, 26
  %s53 = sld [smem:[%s52]]
  %s54 = scalar_lea.smem %s0, 27
  %s55 = sld [smem:[%s54]]
  %s56 = scalar_lea.smem %s0, 28
  %s57 = sld [smem:[%s56]]
  %s58 = scalar_lea.smem %s0, 29
  %s59 = sld [smem:[%s58]]
  %s60 = scalar_lea.smem %s0, 30
  %s61 = sld [smem:[%s60]]
  %s62 = scalar_lea.smem %s0, 31
  %s63 = sld [smem:[%s62]]
  %s64 = scalar_lea.smem %s0, 32
  %s65 = sld [smem:[%s64]]
  %s66 = scalar_lea.smem %s0, 33
  %s67 = sld [smem:[%s66]]
  %s68 = scalar_lea.smem %s0, 34
  %s69 = sld [smem:[%s68]]
  %s70 = scalar_lea.smem %s0, 35
  %s71 = sld [smem:[%s70]]
  %s72 = scalar_lea.smem %s0, 36
  %s73 = sld [smem:[%s72]]
  %s74 = scalar_lea.smem %s0, 37
  %s75 = sld [smem:[%s74]]
  %s76 = scalar_lea.smem %s0, 38
  %s77 = sld [smem:[%s76]]
  %s78 = scalar_lea.smem %s0, 39
  %s79 = sld [smem:[%s78]]
  %s80 = scalar_lea.smem %s0, 40
  %s81 = sld [smem:[%s80]]
  %s82 = scalar_lea.smem %s0, 41
  %s83 = sld [smem:[%s82]]
  %s84 = scalar_lea.smem %s0, 42
  %s85 = sld [smem:[%s84]]
  %s86 = scalar_lea.smem %s0, 43
  %s87 = sld [smem:[%s86]]
  %s88 = scalar_lea.smem %s0, 44
  %s89 = sld [smem:[%s88]]
  %s90 = scalar_lea.smem %s0, 45
  %s91 = sld [smem:[%s90]]
  %s92 = scalar_lea.smem %s0, 46
  %s93 = sld [smem:[%s92]]
  %s94 = scalar_lea.smem %s0, 47
  %s95 = sld [smem:[%s94]]
  %s96 = scalar_lea.smem %s0, 48
  %s97 = sld [smem:[%s96]]
  %s98 = scalar_lea.smem %s0, 49
  %s99 = sld [smem:[%s98]]
  %s100 = scalar_lea.smem %s0, 50
  %s101 = sld [smem:[%s100]]
  %s102 = scalar_lea.smem %s0, 51
  %s103 = sld [smem:[%s102]]
  %s104 = scalar_lea.smem %s0, 52
  %s105 = sld [smem:[%s104]]
  %s106 = scalar_lea.smem %s0, 53
  %s107 = sld [smem:[%s106]]
  %s108 = scalar_lea.smem %s0, 54
  %s109 = sld [smem:[%s108]]
  %s110 = scalar_lea.smem %s0, 55
  %s111 = sld [smem:[%s110]]
  %s112 = scalar_lea.smem %s0, 56
  %s113 = sld [smem:[%s112]]
  %s114 = scalar_lea.smem %s0, 57
  %s115 = sld [smem:[%s114]]
  %s116 = scalar_lea.smem %s0, 58
  %s117 = sld [smem:[%s116]]
  %s118 = scalar_lea.smem %s0, 59
  %s119 = sld [smem:[%s118]]
  %s120 = scalar_lea.smem %s0, 60
  %s121 = sld [smem:[%s120]]
  %s122 = scalar_lea.smem %s0, 61
  %s123 = sld [smem:[%s122]]
  %s124 = scalar_lea.smem %s0, 62
  %s125 = sld [smem:[%s124]]
  %s126 = scalar_lea.smem %s0, 63
  %s127 = sld [smem:[%s126]]
  %s128 = scalar_lea.smem %s0, 64
  %s129 = sld [smem:[%s128]]
  %s130 = scalar_lea.smem %s0, 65
  %s131 = sld [smem:[%s130]]
  %s132 = scalar_lea.smem %s0, 66
  %s133 = sld [smem:[%s132]]
  %s134 = scalar_lea.smem %s0, 67
  %s135 = sld [smem:[%s134]]
  %s136 = scalar_lea.smem %s0, 68
  %s137 = sld [smem:[%s136]]
  %s138 = scalar_lea.smem %s0, 69
  %s139 = sld [smem:[%s138]]
  %s140 = scalar_lea.smem %s0, 70
  %s141 = sld [smem:[%s140]]
  %s142 = scalar_lea.smem %s0, 71
  %s143 = sld [smem:[%s142]]
  %s144 = sld [smem:[#allocation0]]
  $region354: #{dehnn_forward.1} parent=0
    _
  %s146 = ssub.s32 1, %s144
  %s147 = scalar_select 0, %s146, %s144
  %v148 = vstv %s141
  %149 = vst [vmem:[#allocation2] sm:$0x1] %v148
  $region1: #{dehnn_forward.1} parent=0
    #allocation3 [shape = 'u8[512]{0}', space=vmem, size = 0x400, scoped, tag = 'input window, operand 39, single buffered']
    #allocation4 [shape = 's32[1]{0}', space=sflag, size = 0x4, scoped, tag = 'scoped memory for dehnn_forward.1']
    #allocation5 [shape = 'u8[512]{0}', space=vmem, size = 0x400, scoped, tag = 'input window, operand 41, single buffered']
    #allocation6 [shape = 's32[1]{0}', space=sflag, size = 0x4, scoped, tag = 'scoped memory for dehnn_forward.1']
    #allocation7 [shape = 'u8[512]{0}', space=vmem, size = 0x400, scoped, tag = 'input window, operand 43, single buffered']
    #allocation8 [shape = 'u8[512]{0}', space=vmem, size = 0x400, scoped, tag = 'input window, operand 45, single buffered']
    #allocation9 [shape = 's32[1]{0}', space=sflag, size = 0x4, scoped, tag = 'scoped memory for dehnn_forward.1']
    #allocation10 [shape = 'u8[512]{0}', space=vmem, size = 0x400, scoped, tag = 'input window, operand 48, single buffered']
    #allocation11 [shape = 'u8[512]{0}', space=vmem, size = 0x400, scoped, tag = 'input window, operand 50, single buffered']
    #allocation12 [shape = 's32[1]{0}', space=sflag, size = 0x4, scoped, tag = 'scoped memory for dehnn_forward.1']
    #allocation13 [shape = 'u8[512]{0}', space=vmem, size = 0x400, scoped, tag = 'input window, operand 52, single buffered']
    #allocation14 [shape = 'u8[512]{0}', space=vmem, size = 0x400, scoped, tag = 'input window, operand 54, single buffered']
    #allocation15 [shape = 's32[1]{0}', space=sflag, size = 0x4, scoped, tag = 'scoped memory for dehnn_forward.1']
    #allocation16 [shape = 'u8[512]{0}', space=vmem, size = 0x400, scoped, tag = 'input window, operand 56, single buffered']
    #allocation17 [shape = 'u8[512]{0}', space=vmem, size = 0x400, scoped, tag = 'input window, operand 58, single buffered']
    #allocation18 [shape = 's32[1]{0}', space=sflag, size = 0x4, scoped, tag = 'scoped memory for dehnn_forward.1']
    #allocation19 [shape = 'u8[512]{0}', space=vmem, size = 0x400, scoped, tag = 'input window, operand 60, single buffered']
    #allocation20 [shape = 'u8[512]{0}', space=vmem, size = 0x400, scoped, tag = 'input window, operand 62, single buffered']
    #allocation21 [shape = 's32[1]{0}', space=sflag, size = 0x4, scoped, tag = 'scoped memory for dehnn_forward.1']
    #allocation22 [shape = 'u8[512]{0}', space=vmem, size = 0x400, scoped, tag = 'input window, operand 64, single buffered']
    #allocation23 [shape = 'u8[512]{0}', space=vmem, size = 0x400, scoped, tag = 'input window, operand 66, single buffered']
    #allocation24 [shape = 's32[1]{0}', space=sflag, size = 0x4, scoped, tag = 'scoped memory for dehnn_forward.1']
    #allocation25 [shape = 'u8[512]{0}', space=vmem, size = 0x400, scoped, tag = 'input window, operand 68, single buffered']
    %150 = vsyncpa [#allocation4], 0
    %151 = vsyncpa [#allocation6], 0
    %152 = vsyncpa [#allocation9], 0
    %153 = vsyncpa [#allocation12], 0
    %154 = vsyncpa [#allocation15], 0
    %155 = vsyncpa [#allocation18], 0
    %156 = vsyncpa [#allocation21], 0
    %157 = vsyncpa [#allocation24], 0
    // Predicated region
    $region2: #{dehnn_forward.1} parent=1 // pred_check
      _
    $region3: #{dehnn_forward.1} parent=1 // pred_check_branch
      %159 = sbr.rel (0) target = $region5
    $region4: #{dehnn_forward.1} parent=1 // pred_region
      _
    $region5: #{dehnn_forward.1} parent=1 // pred_fallthru
      _
    // Predicated region
    $region6: #{dehnn_forward.1} parent=1 // pred_check
      _
    $region7: #{dehnn_forward.1} parent=1 // pred_check_branch
      %161 = sbr.rel (0) target = $region9
    $region8: #{dehnn_forward.1} parent=1 // pred_region
      _
    $region9: #{dehnn_forward.1} parent=1 // pred_fallthru
      _
    // Predicated region
    $region10: #{dehnn_forward.1} parent=1 // pred_check
      _
    $region11: #{dehnn_forward.1} parent=1 // pred_check_branch
      %163 = sbr.rel (0) target = $region13
    $region12: #{dehnn_forward.1} parent=1 // pred_region
      _
    $region13: #{dehnn_forward.1} parent=1 // pred_fallthru
      _
    // Predicated region
    $region14: #{dehnn_forward.1} parent=1 // pred_check
      _
    $region15: #{dehnn_forward.1} parent=1 // pred_check_branch
      %165 = sbr.rel (0) target = $region17
    $region16: #{dehnn_forward.1} parent=1 // pred_region
      _
    $region17: #{dehnn_forward.1} parent=1 // pred_fallthru
      _
    // Predicated region
    $region18: #{dehnn_forward.1} parent=1 // pred_check
      _
    $region19: #{dehnn_forward.1} parent=1 // pred_check_branch
      %167 = sbr.rel (0) target = $region21
    $region20: #{dehnn_forward.1} parent=1 // pred_region
      _
    $region21: #{dehnn_forward.1} parent=1 // pred_fallthru
      _
    // Predicated region
    $region22: #{dehnn_forward.1} parent=1 // pred_check
      _
    $region23: #{dehnn_forward.1} parent=1 // pred_check_branch
      %169 = sbr.rel (0) target = $region25
    $region24: #{dehnn_forward.1} parent=1 // pred_region
      _
    $region25: #{dehnn_forward.1} parent=1 // pred_fallthru
      _
    // Predicated region
    $region26: #{dehnn_forward.1} parent=1 // pred_check
      _
    $region27: #{dehnn_forward.1} parent=1 // pred_check_branch
      %171 = sbr.rel (0) target = $region29
    $region28: #{dehnn_forward.1} parent=1 // pred_region
      _
    $region29: #{dehnn_forward.1} parent=1 // pred_fallthru
      _
    // Predicated region
    $region30: #{dehnn_forward.1} parent=1 // pred_check
      _
    $region31: #{dehnn_forward.1} parent=1 // pred_check_branch
      %173 = sbr.rel (0) target = $region33
    $region32: #{dehnn_forward.1} parent=1 // pred_region
      _
    $region33: #{dehnn_forward.1} parent=1 // pred_fallthru
      _
    // Predicated region
    $region34: #{dehnn_forward.1} parent=1 // pred_check
      _
    $region35: #{dehnn_forward.1} parent=1 // pred_check_branch
      %175 = sbr.rel (0) target = $region37
    $region36: #{dehnn_forward.1} parent=1 // pred_region
      _
    $region37: #{dehnn_forward.1} parent=1 // pred_fallthru
      _
    // Predicated region
    $region38: #{dehnn_forward.1} parent=1 // pred_check
      _
    $region39: #{dehnn_forward.1} parent=1 // pred_check_branch
      %177 = sbr.rel (0) target = $region41
    $region40: #{dehnn_forward.1} parent=1 // pred_region
      _
    $region41: #{dehnn_forward.1} parent=1 // pred_fallthru
      _
    // Predicated region
    $region42: #{dehnn_forward.1} parent=1 // pred_check
      _
    $region43: #{dehnn_forward.1} parent=1 // pred_check_branch
      %179 = sbr.rel (0) target = $region45
    $region44: #{dehnn_forward.1} parent=1 // pred_region
      _
    $region45: #{dehnn_forward.1} parent=1 // pred_fallthru
      _
    // Predicated region
    $region46: #{dehnn_forward.1} parent=1 // pred_check
      _
    $region47: #{dehnn_forward.1} parent=1 // pred_check_branch
      %181 = sbr.rel (0) target = $region49
    $region48: #{dehnn_forward.1} parent=1 // pred_region
      _
    $region49: #{dehnn_forward.1} parent=1 // pred_fallthru
      _
    // Predicated region
    $region50: #{dehnn_forward.1} parent=1 // pred_check
      _
    $region51: #{dehnn_forward.1} parent=1 // pred_check_branch
      %183 = sbr.rel (0) target = $region53
    $region52: #{dehnn_forward.1} parent=1 // pred_region
      _
    $region53: #{dehnn_forward.1} parent=1 // pred_fallthru
      _
    // Predicated region
    $region54: #{dehnn_forward.1} parent=1 // pred_check
      _
    $region55: #{dehnn_forward.1} parent=1 // pred_check_branch
      %185 = sbr.rel (0) target = $region57
    $region56: #{dehnn_forward.1} parent=1 // pred_region
      _
    $region57: #{dehnn_forward.1} parent=1 // pred_fallthru
      _
    // Predicated region
    $region58: #{dehnn_forward.1} parent=1 // pred_check
      _
    $region59: #{dehnn_forward.1} parent=1 // pred_check_branch
      %187 = sbr.rel (0) target = $region61
    $region60: #{dehnn_forward.1} parent=1 // pred_region
      _
    $region61: #{dehnn_forward.1} parent=1 // pred_fallthru
      _
    // Predicated region
    $region62: #{dehnn_forward.1} parent=1 // pred_check
      _
    $region63: #{dehnn_forward.1} parent=1 // pred_check_branch
      %189 = sbr.rel (0) target = $region65
    $region64: #{dehnn_forward.1} parent=1 // pred_region
      _
    $region65: #{dehnn_forward.1} parent=1 // pred_fallthru
      _
    // Predicated region
    $region66: #{dehnn_forward.1} parent=1 // pred_check
      _
    $region67: #{dehnn_forward.1} parent=1 // pred_check_branch
      %191 = sbr.rel (0) target = $region69
    $region68: #{dehnn_forward.1} parent=1 // pred_region
      _
    $region69: #{dehnn_forward.1} parent=1 // pred_fallthru
      _
    // Predicated region
    $region70: #{dehnn_forward.1} parent=1 // pred_check
      _
    $region71: #{dehnn_forward.1} parent=1 // pred_check_branch
      %193 = sbr.rel (0) target = $region73
    $region72: #{dehnn_forward.1} parent=1 // pred_region
      _
    $region73: #{dehnn_forward.1} parent=1 // pred_fallthru
      _
    // Predicated region
    $region74: #{dehnn_forward.1} parent=1 // pred_check
      _
    $region75: #{dehnn_forward.1} parent=1 // pred_check_branch
      %195 = sbr.rel (0) target = $region77
    $region76: #{dehnn_forward.1} parent=1 // pred_region
      _
    $region77: #{dehnn_forward.1} parent=1 // pred_fallthru
      _
    // Predicated region
    $region78: #{dehnn_forward.1} parent=1 // pred_check
      _
    $region79: #{dehnn_forward.1} parent=1 // pred_check_branch
      %197 = sbr.rel (0) target = $region81
    $region80: #{dehnn_forward.1} parent=1 // pred_region
      _
    $region81: #{dehnn_forward.1} parent=1 // pred_fallthru
      _
    // Predicated region
    $region82: #{dehnn_forward.1} parent=1 // pred_check
      _
    $region83: #{dehnn_forward.1} parent=1 // pred_check_branch
      %199 = sbr.rel (0) target = $region85
    $region84: #{dehnn_forward.1} parent=1 // pred_region
      _
    $region85: #{dehnn_forward.1} parent=1 // pred_fallthru
      _
    // Predicated region
    $region86: #{dehnn_forward.1} parent=1 // pred_check
      _
    $region87: #{dehnn_forward.1} parent=1 // pred_check_branch
      %201 = sbr.rel (0) target = $region89
    $region88: #{dehnn_forward.1} parent=1 // pred_region
      _
    $region89: #{dehnn_forward.1} parent=1 // pred_fallthru
      _
    // Predicated region
    $region90: #{dehnn_forward.1} parent=1 // pred_check
      _
    $region91: #{dehnn_forward.1} parent=1 // pred_check_branch
      %203 = sbr.rel (0) target = $region93
    $region92: #{dehnn_forward.1} parent=1 // pred_region
      _
    $region93: #{dehnn_forward.1} parent=1 // pred_fallthru
      _
    // Predicated region
    $region94: #{dehnn_forward.1} parent=1 // pred_check
      _
    $region95: #{dehnn_forward.1} parent=1 // pred_check_branch
      %205 = sbr.rel (0) target = $region97
    $region96: #{dehnn_forward.1} parent=1 // pred_region
      _
    $region97: #{dehnn_forward.1} parent=1 // pred_fallthru
      _
    // Predicated region
    $region98: #{dehnn_forward.1} parent=1 // pred_check
      _
    $region99: #{dehnn_forward.1} parent=1 // pred_check_branch
      %207 = sbr.rel (0) target = $region101
    $region100: #{dehnn_forward.1} parent=1 // pred_region
      _
    $region101: #{dehnn_forward.1} parent=1 // pred_fallthru
      _
    // Predicated region
    $region102: #{dehnn_forward.1} parent=1 // pred_check
      _
    $region103: #{dehnn_forward.1} parent=1 // pred_check_branch
      %209 = sbr.rel (0) target = $region105
    $region104: #{dehnn_forward.1} parent=1 // pred_region
      _
    $region105: #{dehnn_forward.1} parent=1 // pred_fallthru
      _
    // Predicated region
    $region106: #{dehnn_forward.1} parent=1 // pred_check
      _
    $region107: #{dehnn_forward.1} parent=1 // pred_check_branch
      %211 = sbr.rel (0) target = $region109
    $region108: #{dehnn_forward.1} parent=1 // pred_region
      _
    $region109: #{dehnn_forward.1} parent=1 // pred_fallthru
      _
    // Predicated region
    $region110: #{dehnn_forward.1} parent=1 // pred_check
      _
    $region111: #{dehnn_forward.1} parent=1 // pred_check_branch
      %213 = sbr.rel (0) target = $region113
    $region112: #{dehnn_forward.1} parent=1 // pred_region
      _
    $region113: #{dehnn_forward.1} parent=1 // pred_fallthru
      _
    // Predicated region
    $region114: #{dehnn_forward.1} parent=1 // pred_check
      _
    $region115: #{dehnn_forward.1} parent=1 // pred_check_branch
      %215 = sbr.rel (0) target = $region117
    $region116: #{dehnn_forward.1} parent=1 // pred_region
      _
    $region117: #{dehnn_forward.1} parent=1 // pred_fallthru
      _
    // Predicated region
    $region118: #{dehnn_forward.1} parent=1 // pred_check
      _
    $region119: #{dehnn_forward.1} parent=1 // pred_check_branch
      %217 = sbr.rel (0) target = $region121
    $region120: #{dehnn_forward.1} parent=1 // pred_region
      _
    $region121: #{dehnn_forward.1} parent=1 // pred_fallthru
      _
    // Predicated region
    $region122: #{dehnn_forward.1} parent=1 // pred_check
      _
    $region123: #{dehnn_forward.1} parent=1 // pred_check_branch
      %219 = sbr.rel (0) target = $region125
    $region124: #{dehnn_forward.1} parent=1 // pred_region
      _
    $region125: #{dehnn_forward.1} parent=1 // pred_fallthru
      _
    // Predicated region
    $region126: #{dehnn_forward.1} parent=1 // pred_check
      _
    $region127: #{dehnn_forward.1} parent=1 // pred_check_branch
      %221 = sbr.rel (0) target = $region129
    $region128: #{dehnn_forward.1} parent=1 // pred_region
      _
    $region129: #{dehnn_forward.1} parent=1 // pred_fallthru
      _
    // Predicated region
    $region130: #{dehnn_forward.1} parent=1 // pred_check
      _
    $region131: #{dehnn_forward.1} parent=1 // pred_check_branch
      %223 = sbr.rel (0) target = $region133
    $region132: #{dehnn_forward.1} parent=1 // pred_region
      _
    $region133: #{dehnn_forward.1} parent=1 // pred_fallthru
      _
    // Predicated region
    $region134: #{dehnn_forward.1} parent=1 // pred_check
      _
    $region135: #{dehnn_forward.1} parent=1 // pred_check_branch
      %225 = sbr.rel (0) target = $region137
    $region136: #{dehnn_forward.1} parent=1 // pred_region
      _
    $region137: #{dehnn_forward.1} parent=1 // pred_fallthru
      _
    // Predicated region
    $region138: #{dehnn_forward.1} parent=1 // pred_check
      _
    $region139: #{dehnn_forward.1} parent=1 // pred_check_branch
      %227 = sbr.rel (0) target = $region141
    $region140: #{dehnn_forward.1} parent=1 // pred_region
      _
    $region141: #{dehnn_forward.1} parent=1 // pred_fallthru
      _
    // Predicated region
    $region142: #{dehnn_forward.1} parent=1 // pred_check
      _
    $region143: #{dehnn_forward.1} parent=1 // pred_check_branch
      %229 = sbr.rel (0) target = $region145
    $region144: #{dehnn_forward.1} parent=1 // pred_region
      _
    $region145: #{dehnn_forward.1} parent=1 // pred_fallthru
      _
    // Predicated region
    $region146: #{dehnn_forward.1} parent=1 // pred_check
      _
    $region147: #{dehnn_forward.1} parent=1 // pred_check_branch
      %231 = sbr.rel (0) target = $region149
    $region148: #{dehnn_forward.1} parent=1 // pred_region
      _
    $region149: #{dehnn_forward.1} parent=1 // pred_fallthru
      _
    // Predicated region
    $region150: #{dehnn_forward.1} parent=1 // pred_check
      _
    $region151: #{dehnn_forward.1} parent=1 // pred_check_branch
      %233 = sbr.rel (0) target = $region153
    $region152: #{dehnn_forward.1} parent=1 // pred_region
      _
    $region153: #{dehnn_forward.1} parent=1 // pred_fallthru
      _
    // Predicated region
    $region154: #{dehnn_forward.1} parent=1 // pred_check
      _
    $region155: #{dehnn_forward.1} parent=1 // pred_check_branch
      %235 = sbr.rel (0) target = $region157
    $region156: #{dehnn_forward.1} parent=1 // pred_region
      _
    $region157: #{dehnn_forward.1} parent=1 // pred_fallthru
      _
    // Predicated region
    $region158: #{dehnn_forward.1} parent=1 // pred_check
      _
    $region159: #{dehnn_forward.1} parent=1 // pred_check_branch
      %237 = sbr.rel (0) target = $region161
    $region160: #{dehnn_forward.1} parent=1 // pred_region
      %s239 = ssub.s32 16, 16
      %240 = vsyncadd [#allocation4], %s239
      %s242 = sshll.u32 [#allocation3], 4
      %s243 = int_to_ptr.vmem [resolvable:$true] %s242
      %245 = dma.hbm_to_vmem [thread:$0]  %s79, 16, %s243, [#allocation4]
    $region161: #{dehnn_forward.1} parent=1 // pred_fallthru
      _
    // Predicated region
    $region162: #{dehnn_forward.1} parent=1 // pred_check
      _
    $region163: #{dehnn_forward.1} parent=1 // pred_check_branch
      %247 = sbr.rel (0) target = $region165
    $region164: #{dehnn_forward.1} parent=1 // pred_region
      _
    $region165: #{dehnn_forward.1} parent=1 // pred_fallthru
      _
    // Predicated region
    $region166: #{dehnn_forward.1} parent=1 // pred_check
      _
    $region167: #{dehnn_forward.1} parent=1 // pred_check_branch
      %249 = sbr.rel (0) target = $region169
    $region168: #{dehnn_forward.1} parent=1 // pred_region
      %s251 = ssub.s32 16, 16
      %252 = vsyncadd [#allocation6], %s251
      %s254 = sshll.u32 [#allocation5], 4
      %s255 = int_to_ptr.vmem [resolvable:$true] %s254
      %257 = dma.hbm_to_vmem [thread:$0]  %s83, 16, %s255, [#allocation6]
    $region169: #{dehnn_forward.1} parent=1 // pred_fallthru
      _
    // Predicated region
    $region170: #{dehnn_forward.1} parent=1 // pred_check
      _
    $region171: #{dehnn_forward.1} parent=1 // pred_check_branch
      %259 = sbr.rel (0) target = $region173
    $region172: #{dehnn_forward.1} parent=1 // pred_region
      _
    $region173: #{dehnn_forward.1} parent=1 // pred_fallthru
      _
    // Predicated region
    $region174: #{dehnn_forward.1} parent=1 // pred_check
      _
    $region175: #{dehnn_forward.1} parent=1 // pred_check_branch
      %261 = sbr.rel (0) target = $region177
    $region176: #{dehnn_forward.1} parent=1 // pred_region
      %s263 = ssub.s32 16, 16
      %264 = vsyncadd [#allocation6], %s263
      %s266 = sshll.u32 [#allocation7], 4
      %s267 = int_to_ptr.vmem [resolvable:$true] %s266
      %269 = dma.hbm_to_vmem [thread:$0]  %s87, 16, %s267, [#allocation6]
    $region177: #{dehnn_forward.1} parent=1 // pred_fallthru
      _
    // Predicated region
    $region178: #{dehnn_forward.1} parent=1 // pred_check
      _
    $region179: #{dehnn_forward.1} parent=1 // pred_check_branch
      %271 = sbr.rel (0) target = $region181
    $region180: #{dehnn_forward.1} parent=1 // pred_region
      _
    $region181: #{dehnn_forward.1} parent=1 // pred_fallthru
      _
    // Predicated region
    $region182: #{dehnn_forward.1} parent=1 // pred_check
      _
    $region183: #{dehnn_forward.1} parent=1 // pred_check_branch
      %273 = sbr.rel (0) target = $region185
    $region184: #{dehnn_forward.1} parent=1 // pred_region
      %s275 = ssub.s32 16, 16
      %276 = vsyncadd [#allocation9], %s275
      %s278 = sshll.u32 [#allocation8], 4
      %s279 = int_to_ptr.vmem [resolvable:$true] %s278
      %281 = dma.hbm_to_vmem [thread:$0]  %s91, 16, %s279, [#allocation9]
    $region185: #{dehnn_forward.1} parent=1 // pred_fallthru
      _
    // Predicated region
    $region186: #{dehnn_forward.1} parent=1 // pred_check
      _
    $region187: #{dehnn_forward.1} parent=1 // pred_check_branch
      %283 = sbr.rel (0) target = $region189
    $region188: #{dehnn_forward.1} parent=1 // pred_region
      _
    $region189: #{dehnn_forward.1} parent=1 // pred_fallthru
      _
    // Predicated region
    $region190: #{dehnn_forward.1} parent=1 // pred_check
      _
    $region191: #{dehnn_forward.1} parent=1 // pred_check_branch
      %285 = sbr.rel (0) target = $region193
    $region192: #{dehnn_forward.1} parent=1 // pred_region
      _
    $region193: #{dehnn_forward.1} parent=1 // pred_fallthru
      _
    // Predicated region
    $region194: #{dehnn_forward.1} parent=1 // pred_check
      _
    $region195: #{dehnn_forward.1} parent=1 // pred_check_branch
      %287 = sbr.rel (0) target = $region197
    $region196: #{dehnn_forward.1} parent=1 // pred_region
      %s289 = ssub.s32 16, 16
      %290 = vsyncadd [#allocation9], %s289
      %s292 = sshll.u32 [#allocation10], 4
      %s293 = int_to_ptr.vmem [resolvable:$true] %s292
      %295 = dma.hbm_to_vmem [thread:$0]  %s97, 16, %s293, [#allocation9]
    $region197: #{dehnn_forward.1} parent=1 // pred_fallthru
      _
    // Predicated region
    $region198: #{dehnn_forward.1} parent=1 // pred_check
      _
    $region199: #{dehnn_forward.1} parent=1 // pred_check_branch
      %297 = sbr.rel (0) target = $region201
    $region200: #{dehnn_forward.1} parent=1 // pred_region
      _
    $region201: #{dehnn_forward.1} parent=1 // pred_fallthru
      _
    // Predicated region
    $region202: #{dehnn_forward.1} parent=1 // pred_check
      _
    $region203: #{dehnn_forward.1} parent=1 // pred_check_branch
      %299 = sbr.rel (0) target = $region205
    $region204: #{dehnn_forward.1} parent=1 // pred_region
      %s301 = ssub.s32 16, 16
      %302 = vsyncadd [#allocation12], %s301
      %s304 = sshll.u32 [#allocation11], 4
      %s305 = int_to_ptr.vmem [resolvable:$true] %s304
      %307 = dma.hbm_to_vmem [thread:$0]  %s101, 16, %s305, [#allocation12]
    $region205: #{dehnn_forward.1} parent=1 // pred_fallthru
      _
    // Predicated region
    $region206: #{dehnn_forward.1} parent=1 // pred_check
      _
    $region207: #{dehnn_forward.1} parent=1 // pred_check_branch
      %309 = sbr.rel (0) target = $region209
    $region208: #{dehnn_forward.1} parent=1 // pred_region
      _
    $region209: #{dehnn_forward.1} parent=1 // pred_fallthru
      _
    // Predicated region
    $region210: #{dehnn_forward.1} parent=1 // pred_check
      _
    $region211: #{dehnn_forward.1} parent=1 // pred_check_branch
      %311 = sbr.rel (0) target = $region213
    $region212: #{dehnn_forward.1} parent=1 // pred_region
      %s313 = ssub.s32 16, 16
      %314 = vsyncadd [#allocation12], %s313
      %s316 = sshll.u32 [#allocation13], 4
      %s317 = int_to_ptr.vmem [resolvable:$true] %s316
      %319 = dma.hbm_to_vmem [thread:$0]  %s105, 16, %s317, [#allocation12]
    $region213: #{dehnn_forward.1} parent=1 // pred_fallthru
      _
    // Predicated region
    $region214: #{dehnn_forward.1} parent=1 // pred_check
      _
    $region215: #{dehnn_forward.1} parent=1 // pred_check_branch
      %321 = sbr.rel (0) target = $region217
    $region216: #{dehnn_forward.1} parent=1 // pred_region
      _
    $region217: #{dehnn_forward.1} parent=1 // pred_fallthru
      _
    // Predicated region
    $region218: #{dehnn_forward.1} parent=1 // pred_check
      _
    $region219: #{dehnn_forward.1} parent=1 // pred_check_branch
      %323 = sbr.rel (0) target = $region221
    $region220: #{dehnn_forward.1} parent=1 // pred_region
      %s325 = ssub.s32 16, 16
      %326 = vsyncadd [#allocation15], %s325
      %s328 = sshll.u32 [#allocation14], 4
      %s329 = int_to_ptr.vmem [resolvable:$true] %s328
      %331 = dma.hbm_to_vmem [thread:$0]  %s109, 16, %s329, [#allocation15]
    $region221: #{dehnn_forward.1} parent=1 // pred_fallthru
      _
    // Predicated region
    $region222: #{dehnn_forward.1} parent=1 // pred_check
      _
    $region223: #{dehnn_forward.1} parent=1 // pred_check_branch
      %333 = sbr.rel (0) target = $region225
    $region224: #{dehnn_forward.1} parent=1 // pred_region
      _
    $region225: #{dehnn_forward.1} parent=1 // pred_fallthru
      _
    // Predicated region
    $region226: #{dehnn_forward.1} parent=1 // pred_check
      _
    $region227: #{dehnn_forward.1} parent=1 // pred_check_branch
      %335 = sbr.rel (0) target = $region229
    $region228: #{dehnn_forward.1} parent=1 // pred_region
      %s337 = ssub.s32 16, 16
      %338 = vsyncadd [#allocation15], %s337
      %s340 = sshll.u32 [#allocation16], 4
      %s341 = int_to_ptr.vmem [resolvable:$true] %s340
      %343 = dma.hbm_to_vmem [thread:$0]  %s113, 16, %s341, [#allocation15]
    $region229: #{dehnn_forward.1} parent=1 // pred_fallthru
      _
    // Predicated region
    $region230: #{dehnn_forward.1} parent=1 // pred_check
      _
    $region231: #{dehnn_forward.1} parent=1 // pred_check_branch
      %345 = sbr.rel (0) target = $region233
    $region232: #{dehnn_forward.1} parent=1 // pred_region
      _
    $region233: #{dehnn_forward.1} parent=1 // pred_fallthru
      _
    // Predicated region
    $region234: #{dehnn_forward.1} parent=1 // pred_check
      _
    $region235: #{dehnn_forward.1} parent=1 // pred_check_branch
      %347 = sbr.rel (0) target = $region237
    $region236: #{dehnn_forward.1} parent=1 // pred_region
      %s349 = ssub.s32 16, 16
      %350 = vsyncadd [#allocation18], %s349
      %s352 = sshll.u32 [#allocation17], 4
      %s353 = int_to_ptr.vmem [resolvable:$true] %s352
      %355 = dma.hbm_to_vmem [thread:$0]  %s117, 16, %s353, [#allocation18]
    $region237: #{dehnn_forward.1} parent=1 // pred_fallthru
      _
    // Predicated region
    $region238: #{dehnn_forward.1} parent=1 // pred_check
      _
    $region239: #{dehnn_forward.1} parent=1 // pred_check_branch
      %357 = sbr.rel (0) target = $region241
    $region240: #{dehnn_forward.1} parent=1 // pred_region
      _
    $region241: #{dehnn_forward.1} parent=1 // pred_fallthru
      _
    // Predicated region
    $region242: #{dehnn_forward.1} parent=1 // pred_check
      _
    $region243: #{dehnn_forward.1} parent=1 // pred_check_branch
      %359 = sbr.rel (0) target = $region245
    $region244: #{dehnn_forward.1} parent=1 // pred_region
      %s361 = ssub.s32 16, 16
      %362 = vsyncadd [#allocation18], %s361
      %s364 = sshll.u32 [#allocation19], 4
      %s365 = int_to_ptr.vmem [resolvable:$true] %s364
      %367 = dma.hbm_to_vmem [thread:$0]  %s121, 16, %s365, [#allocation18]
    $region245: #{dehnn_forward.1} parent=1 // pred_fallthru
      _
    // Predicated region
    $region246: #{dehnn_forward.1} parent=1 // pred_check
      _
    $region247: #{dehnn_forward.1} parent=1 // pred_check_branch
      %369 = sbr.rel (0) target = $region249
    $region248: #{dehnn_forward.1} parent=1 // pred_region
      _
    $region249: #{dehnn_forward.1} parent=1 // pred_fallthru
      _
    // Predicated region
    $region250: #{dehnn_forward.1} parent=1 // pred_check
      _
    $region251: #{dehnn_forward.1} parent=1 // pred_check_branch
      %371 = sbr.rel (0) target = $region253
    $region252: #{dehnn_forward.1} parent=1 // pred_region
      %s373 = ssub.s32 16, 16
      %374 = vsyncadd [#allocation21], %s373
      %s376 = sshll.u32 [#allocation20], 4
      %s377 = int_to_ptr.vmem [resolvable:$true] %s376
      %379 = dma.hbm_to_vmem [thread:$0]  %s125, 16, %s377, [#allocation21]
    $region253: #{dehnn_forward.1} parent=1 // pred_fallthru
      _
    // Predicated region
    $region254: #{dehnn_forward.1} parent=1 // pred_check
      _
    $region255: #{dehnn_forward.1} parent=1 // pred_check_branch
      %381 = sbr.rel (0) target = $region257
    $region256: #{dehnn_forward.1} parent=1 // pred_region
      _
    $region257: #{dehnn_forward.1} parent=1 // pred_fallthru
      _
    // Predicated region
    $region258: #{dehnn_forward.1} parent=1 // pred_check
      _
    $region259: #{dehnn_forward.1} parent=1 // pred_check_branch
      %383 = sbr.rel (0) target = $region261
    $region260: #{dehnn_forward.1} parent=1 // pred_region
      %s385 = ssub.s32 16, 16
      %386 = vsyncadd [#allocation21], %s385
      %s388 = sshll.u32 [#allocation22], 4
      %s389 = int_to_ptr.vmem [resolvable:$true] %s388
      %391 = dma.hbm_to_vmem [thread:$0]  %s129, 16, %s389, [#allocation21]
    $region261: #{dehnn_forward.1} parent=1 // pred_fallthru
      _
    // Predicated region
    $region262: #{dehnn_forward.1} parent=1 // pred_check
      _
    $region263: #{dehnn_forward.1} parent=1 // pred_check_branch
      %393 = sbr.rel (0) target = $region265
    $region264: #{dehnn_forward.1} parent=1 // pred_region
      _
    $region265: #{dehnn_forward.1} parent=1 // pred_fallthru
      _
    // Predicated region
    $region266: #{dehnn_forward.1} parent=1 // pred_check
      _
    $region267: #{dehnn_forward.1} parent=1 // pred_check_branch
      %395 = sbr.rel (0) target = $region269
    $region268: #{dehnn_forward.1} parent=1 // pred_region
      %s397 = ssub.s32 16, 16
      %398 = vsyncadd [#allocation24], %s397
      %s400 = sshll.u32 [#allocation23], 4
      %s401 = int_to_ptr.vmem [resolvable:$true] %s400
      %403 = dma.hbm_to_vmem [thread:$0]  %s133, 16, %s401, [#allocation24]
    $region269: #{dehnn_forward.1} parent=1 // pred_fallthru
      _
    // Predicated region
    $region270: #{dehnn_forward.1} parent=1 // pred_check
      _
    $region271: #{dehnn_forward.1} parent=1 // pred_check_branch
      %405 = sbr.rel (0) target = $region273
    $region272: #{dehnn_forward.1} parent=1 // pred_region
      _
    $region273: #{dehnn_forward.1} parent=1 // pred_fallthru
      _
    // Predicated region
    $region274: #{dehnn_forward.1} parent=1 // pred_check
      _
    $region275: #{dehnn_forward.1} parent=1 // pred_check_branch
      %407 = sbr.rel (0) target = $region277
    $region276: #{dehnn_forward.1} parent=1 // pred_region
      %s409 = ssub.s32 16, 16
      %410 = vsyncadd [#allocation24], %s409
      %s412 = sshll.u32 [#allocation25], 4
      %s413 = int_to_ptr.vmem [resolvable:$true] %s412
      %415 = dma.hbm_to_vmem [thread:$0]  %s137, 16, %s413, [#allocation24]
    $region277: #{dehnn_forward.1} parent=1 // pred_fallthru
      _
    // Predicated region
    $region278: #{dehnn_forward.1} parent=1 // pred_check
      _
    $region279: #{dehnn_forward.1} parent=1 // pred_check_branch
      %417 = sbr.rel (0) target = $region281
    $region280: #{dehnn_forward.1} parent=1 // pred_region
      _
    $region281: #{dehnn_forward.1} parent=1 // pred_fallthru
      _
    // Predicated region
    $region282: #{dehnn_forward.1} parent=1 // pred_check
      _
    $region283: #{dehnn_forward.1} parent=1 // pred_check_branch
      %419 = sbr.rel (0) target = $region285
    $region284: #{dehnn_forward.1} parent=1 // pred_region
      _
    $region285: #{dehnn_forward.1} parent=1 // pred_fallthru
      _
    // Predicated region
    $region286: #{dehnn_forward.1} parent=1 // pred_check
      _
    $region287: #{dehnn_forward.1} parent=1 // pred_check_branch
      %421 = sbr.rel (0) target = $region289
    $region288: #{dehnn_forward.1} parent=1 // pred_region
      %422 = dma.done [#allocation4], 16
    $region289: #{dehnn_forward.1} parent=1 // pred_fallthru
      _
    // Predicated region
    $region290: #{dehnn_forward.1} parent=1 // pred_check
      _
    $region291: #{dehnn_forward.1} parent=1 // pred_check_branch
      %424 = sbr.rel (0) target = $region293
    $region292: #{dehnn_forward.1} parent=1 // pred_region
      %425 = dma.done [#allocation6], 16
    $region293: #{dehnn_forward.1} parent=1 // pred_fallthru
      _
    // Predicated region
    $region294: #{dehnn_forward.1} parent=1 // pred_check
      _
    $region295: #{dehnn_forward.1} parent=1 // pred_check_branch
      %427 = sbr.rel (0) target = $region297
    $region296: #{dehnn_forward.1} parent=1 // pred_region
      %428 = dma.done [#allocation6], 16
    $region297: #{dehnn_forward.1} parent=1 // pred_fallthru
      _
    // Predicated region
    $region298: #{dehnn_forward.1} parent=1 // pred_check
      _
    $region299: #{dehnn_forward.1} parent=1 // pred_check_branch
      %430 = sbr.rel (0) target = $region301
    $region300: #{dehnn_forward.1} parent=1 // pred_region
      %431 = dma.done [#allocation9], 16
    $region301: #{dehnn_forward.1} parent=1 // pred_fallthru
      _
    // Predicated region
    $region302: #{dehnn_forward.1} parent=1 // pred_check
      _
    $region303: #{dehnn_forward.1} parent=1 // pred_check_branch
      %433 = sbr.rel (0) target = $region305
    $region304: #{dehnn_forward.1} parent=1 // pred_region
      %434 = dma.done [#allocation9], 16
    $region305: #{dehnn_forward.1} parent=1 // pred_fallthru
      _
    // Predicated region
    $region306: #{dehnn_forward.1} parent=1 // pred_check
      _
    $region307: #{dehnn_forward.1} parent=1 // pred_check_branch
      %436 = sbr.rel (0) target = $region309
    $region308: #{dehnn_forward.1} parent=1 // pred_region
      %437 = dma.done [#allocation12], 16
    $region309: #{dehnn_forward.1} parent=1 // pred_fallthru
      _
    // Predicated region
    $region310: #{dehnn_forward.1} parent=1 // pred_check
      _
    $region311: #{dehnn_forward.1} parent=1 // pred_check_branch
      %439 = sbr.rel (0) target = $region313
    $region312: #{dehnn_forward.1} parent=1 // pred_region
      %440 = dma.done [#allocation12], 16
    $region313: #{dehnn_forward.1} parent=1 // pred_fallthru
      _
    // Predicated region
    $region314: #{dehnn_forward.1} parent=1 // pred_check
      _
    $region315: #{dehnn_forward.1} parent=1 // pred_check_branch
      %442 = sbr.rel (0) target = $region317
    $region316: #{dehnn_forward.1} parent=1 // pred_region
      %443 = dma.done [#allocation15], 16
    $region317: #{dehnn_forward.1} parent=1 // pred_fallthru
      _
    // Predicated region
    $region318: #{dehnn_forward.1} parent=1 // pred_check
      _
    $region319: #{dehnn_forward.1} parent=1 // pred_check_branch
      %445 = sbr.rel (0) target = $region321
    $region320: #{dehnn_forward.1} parent=1 // pred_region
      %446 = dma.done [#allocation15], 16
    $region321: #{dehnn_forward.1} parent=1 // pred_fallthru
      _
    // Predicated region
    $region322: #{dehnn_forward.1} parent=1 // pred_check
      _
    $region323: #{dehnn_forward.1} parent=1 // pred_check_branch
      %448 = sbr.rel (0) target = $region325
    $region324: #{dehnn_forward.1} parent=1 // pred_region
      %449 = dma.done [#allocation18], 16
    $region325: #{dehnn_forward.1} parent=1 // pred_fallthru
      _
    // Predicated region
    $region326: #{dehnn_forward.1} parent=1 // pred_check
      _
    $region327: #{dehnn_forward.1} parent=1 // pred_check_branch
      %451 = sbr.rel (0) target = $region329
    $region328: #{dehnn_forward.1} parent=1 // pred_region
      %452 = dma.done [#allocation18], 16
    $region329: #{dehnn_forward.1} parent=1 // pred_fallthru
      _
    // Predicated region
    $region330: #{dehnn_forward.1} parent=1 // pred_check
      _
    $region331: #{dehnn_forward.1} parent=1 // pred_check_branch
      %454 = sbr.rel (0) target = $region333
    $region332: #{dehnn_forward.1} parent=1 // pred_region
      %455 = dma.done [#allocation21], 16
    $region333: #{dehnn_forward.1} parent=1 // pred_fallthru
      _
    // Predicated region
    $region334: #{dehnn_forward.1} parent=1 // pred_check
      _
    $region335: #{dehnn_forward.1} parent=1 // pred_check_branch
      %457 = sbr.rel (0) target = $region337
    $region336: #{dehnn_forward.1} parent=1 // pred_region
      %458 = dma.done [#allocation21], 16
    $region337: #{dehnn_forward.1} parent=1 // pred_fallthru
      _
    // Predicated region
    $region338: #{dehnn_forward.1} parent=1 // pred_check
      _
    $region339: #{dehnn_forward.1} parent=1 // pred_check_branch
      %460 = sbr.rel (0) target = $region341
    $region340: #{dehnn_forward.1} parent=1 // pred_region
      %461 = dma.done [#allocation24], 16
    $region341: #{dehnn_forward.1} parent=1 // pred_fallthru
      _
    // Predicated region
    $region342: #{dehnn_forward.1} parent=1 // pred_check
      _
    $region343: #{dehnn_forward.1} parent=1 // pred_check_branch
      %463 = sbr.rel (0) target = $region345
    $region344: #{dehnn_forward.1} parent=1 // pred_region
      %464 = dma.done [#allocation24], 16
    $region345: #{dehnn_forward.1} parent=1 // pred_fallthru
      _
    %v465 = vld [vmem:[%s3] sm:$0xff]
    %v466 = vld [vmem:[%s3 + $0x8] sm:$0x3]
    %v467 = vld [vmem:[%s5] sm:$0xf]
    %v468 = vld [vmem:[%s9] sm:$0xff]
    %v469 = vld [vmem:[%s9 + $0x8] sm:$0xf]
    %v470 = vld [vmem:[%s11] sm:$0xff]
    %v471 = vld [vmem:[%s11 + $0x8] sm:$0x3]
    %v472 = vld [vmem:[%s13] sm:$0xff]
    %v473 = vld [vmem:[%s13 + $0x8] sm:$0x3]
    %v474 = vld [vmem:[%s17] sm:$0xff]
    %v475 = vld [vmem:[%s17 + $0x8] sm:$0xf]
    %v476 = vld [vmem:[%s19] sm:$0x3f]
    %v477 = vld [vmem:[%s21] sm:$0x1]
    %v478 = vld [vmem:[%s23] sm:$0xff]
    %v479 = vld [vmem:[%s23 + $0x8] sm:$0xff]
    %v480 = vld [vmem:[%s23 + $0x10] sm:$0xff]
    %v481 = vld [vmem:[%s25] sm:$0x1]
    %v482 = vld [vmem:[%s69] sm:$0xff]
    %v483 = vld [vmem:[%s71] sm:$0x1]
    %v484 = vld [vmem:[%s73] sm:$0xff]
    %v485 = vld [vmem:[%s73 + $0x8] sm:$0xff]
    %v486 = vld [vmem:[%s73 + $0x10] sm:$0xff]
    %v487 = vld [vmem:[%s75] sm:$0x1]
    %v489 = vlaneseq
    %v490 = vshrl.u32 %v489, 7
    %v491 = vsub.s32 0, %v490
    %v492 = vrot.slane %v477, %v491
    %vm494 = vcmask 48128
    %v496 = vsel %vm494, %v465, 0
    %v499 = vsel %vm494, %v466, 0
    %vm501 = vcmask 1045504
    %v503 = vsel %vm501, %v476, 0
    %505 = vmatprep.subr.mxu0 0.0
    %506 = vmatpush1.msra.mxu0 %v503
    %507 = vmatprep.subr.mxu0 0.0
    %508 = vmatpush1.msra.mxu0 0.0
    %509 = vmatprep.subr.mxu0 0.0
    %510 = vmatpush1.msra.mxu0 0.0
    %511 = vmatprep.subr.mxu0 0.0
    %512 = vmatpush1.msra.mxu0 0.0
    %513 = vmatprep.subr.mxu0 0.0
    %514 = vmatpush1.msra.mxu0 0.0
    %515 = vmatprep.subr.mxu0 0.0
    %516 = vmatpush1.msra.mxu0 0.0
    %517 = vmatprep.subr.mxu0 0.0
    %518 = vmatpush1.msra.mxu0 0.0
    %519 = vmatprep.subr.mxu0 0.0
    %520 = vmatpush1.msra.mxu0 0.0
    %521 = vmatprep.subr.mxu0 0.0
    %522 = vmatpush1.msra.mxu0 0.0
    %523 = vmatprep.subr.mxu0 0.0
    %524 = vmatpush1.msra.mxu0 0.0
    %525 = vmatprep.subr.mxu0 0.0
    %526 = vmatpush1.msra.mxu0 0.0
    %527 = vmatprep.subr.mxu0 0.0
    %528 = vmatpush1.msra.mxu0 0.0
    %529 = vmatprep.subr.mxu0 0.0
    %530 = vmatpush1.msra.mxu0 0.0
    %531 = vmatprep.subr.mxu0 0.0
    %532 = vmatpush1.msra.mxu0 0.0
    %533 = vmatprep.subr.mxu0 0.0
    %534 = vmatpush1.msra.mxu0 0.0
    %535 = vmatprep.subr.mxu0 0.0
    %536 = vmatpush1.msra.mxu0 0.0
    %537 = vmatprep.subr.mxu0 0.0
    %538 = vmatpush1.msra.mxu0 0.0
    %539 = vmatprep.subr.mxu0 0.0
    %540 = vmatpush1.msra.mxu0 0.0
    %541 = vmatprep.subr.mxu0 0.0
    %542 = vmatpush1.msra.mxu0 0.0
    %543 = vmatprep.subr.mxu0 0.0
    %544 = vmatpush1.msra.mxu0 0.0
    %545 = vmatprep.subr.mxu0 0.0
    %546 = vmatpush1.msra.mxu0 0.0
    %547 = vmatprep.subr.mxu0 0.0
    %548 = vmatpush1.msra.mxu0 0.0
    %549 = vmatprep.subr.mxu0 0.0
    %550 = vmatpush1.msra.mxu0 0.0
    %551 = vmatprep.subr.mxu0 0.0
    %552 = vmatpush1.msra.mxu0 0.0
    %553 = vmatprep.subr.mxu0 0.0
    %554 = vmatpush1.msra.mxu0 0.0
    %555 = vmatprep.subr.mxu0 0.0
    %556 = vmatpush1.msra.mxu0 0.0
    %557 = vmatprep.subr.mxu0 0.0
    %558 = vmatpush1.msra.mxu0 0.0
    %559 = vmatprep.subr.mxu0 0.0
    %560 = vmatpush1.msra.mxu0 0.0
    %561 = vmatprep.subr.mxu0 0.0
    %562 = vmatpush1.msra.mxu0 0.0
    %563 = vmatprep.subr.mxu0 0.0
    %564 = vmatpush1.msra.mxu0 0.0
    %565 = vmatprep.subr.mxu0 0.0
    %566 = vmatpush1.msra.mxu0 0.0
    %567 = vmatprep.subr.mxu0 0.0
    %568 = vmatpush1.msra.mxu0 0.0
    %569 = vmatprep.mubr.f32.mxu0 0.0
    %570 = vmatmul.mubr.f32.gmra.mrb[0].mxu0 %v496
    %v571 = vpop.f32.mrb[0].mxu0
    %v572 = vadd.f32 %v492, %v571
    %v573 = vpop.f32.mrb[0].mxu0
    %574 = vmatprep.mubr.f32.mxu0 0.0
    %575 = vmatmul.mubr.f32.gmra.mrb[0].mxu0 %v499
    %v576 = vpop.f32.mrb[0].mxu0
    %v577 = vadd.f32 %v492, %v576
    %v578 = vpop.f32.mrb[0].mxu0
    %579 = vdwg.mxu0
    %v580 = vmax.f32 %v572, 0.0
    %v581 = vmax.f32 %v577, 0.0
    %v583 = vlaneseq
    %v584 = vshrl.u32 %v583, 7
    %v585 = vsub.s32 0, %v584
    %v586 = vrot.slane %v481, %v585
    %vm588 = vcmask 195584
    %v590 = vsel %vm588, %v580, 0
    %v593 = vsel %vm588, %v581, 0
    %595 = vmatprep.subr.mxu0 0.0
    %596 = vmatpush1.msra.mxu0 %v478
    %597 = vmatprep.subr.mxu0 0.0
    %598 = vmatpush1.msra.mxu0 %v479
    %599 = vmatprep.subr.mxu0 0.0
    %600 = vmatpush1.msra.mxu0 %v480
    %601 = vmatprep.subr.mxu0 0.0
    %602 = vmatpush1.msra.mxu0 0.0
    %603 = vmatprep.subr.mxu0 0.0
    %604 = vmatpush1.msra.mxu0 0.0
    %605 = vmatprep.subr.mxu0 0.0
    %606 = vmatpush1.msra.mxu0 0.0
    %607 = vmatprep.subr.mxu0 0.0
    %608 = vmatpush1.msra.mxu0 0.0
    %609 = vmatprep.subr.mxu0 0.0
    %610 = vmatpush1.msra.mxu0 0.0
    %611 = vmatprep.subr.mxu0 0.0
    %612 = vmatpush1.msra.mxu0 0.0
    %613 = vmatprep.subr.mxu0 0.0
    %614 = vmatpush1.msra.mxu0 0.0
    %615 = vmatprep.subr.mxu0 0.0
    %616 = vmatpush1.msra.mxu0 0.0
    %617 = vmatprep.subr.mxu0 0.0
    %618 = vmatpush1.msra.mxu0 0.0
    %619 = vmatprep.subr.mxu0 0.0
    %620 = vmatpush1.msra.mxu0 0.0
    %621 = vmatprep.subr.mxu0 0.0
    %622 = vmatpush1.msra.mxu0 0.0
    %623 = vmatprep.subr.mxu0 0.0
    %624 = vmatpush1.msra.mxu0 0.0
    %625 = vmatprep.subr.mxu0 0.0
    %626 = vmatpush1.msra.mxu0 0.0
    %627 = vmatprep.subr.mxu0 0.0
    %628 = vmatpush1.msra.mxu0 0.0
    %629 = vmatprep.subr.mxu0 0.0
    %630 = vmatpush1.msra.mxu0 0.0
    %631 = vmatprep.subr.mxu0 0.0
    %632 = vmatpush1.msra.mxu0 0.0
    %633 = vmatprep.subr.mxu0 0.0
    %634 = vmatpush1.msra.mxu0 0.0
    %635 = vmatprep.subr.mxu0 0.0
    %636 = vmatpush1.msra.mxu0 0.0
    %637 = vmatprep.subr.mxu0 0.0
    %638 = vmatpush1.msra.mxu0 0.0
    %639 = vmatprep.subr.mxu0 0.0
    %640 = vmatpush1.msra.mxu0 0.0
    %641 = vmatprep.subr.mxu0 0.0
    %642 = vmatpush1.msra.mxu0 0.0
    %643 = vmatprep.subr.mxu0 0.0
    %644 = vmatpush1.msra.mxu0 0.0
    %645 = vmatprep.subr.mxu0 0.0
    %646 = vmatpush1.msra.mxu0 0.0
    %647 = vmatprep.subr.mxu0 0.0
    %648 = vmatpush1.msra.mxu0 0.0
    %649 = vmatprep.subr.mxu0 0.0
    %650 = vmatpush1.msra.mxu0 0.0
    %651 = vmatprep.subr.mxu0 0.0
    %652 = vmatpush1.msra.mxu0 0.0
    %653 = vmatprep.subr.mxu0 0.0
    %654 = vmatpush1.msra.mxu0 0.0
    %655 = vmatprep.subr.mxu0 0.0
    %656 = vmatpush1.msra.mxu0 0.0
    %657 = vmatprep.subr.mxu0 0.0
    %658 = vmatpush1.msra.mxu0 0.0
    %659 = vmatprep.mubr.f32.mxu0 0.0
    %660 = vmatmul.mubr.f32.gmra.mrb[0].mxu0 %v590
    %v661 = vpop.f32.mrb[0].mxu0
    %v662 = vadd.f32 %v586, %v661
    %v663 = vpop.f32.mrb[0].mxu0
    %664 = vmatprep.mubr.f32.mxu0 0.0
    %665 = vmatmul.mubr.f32.gmra.mrb[0].mxu0 %v593
    %v666 = vpop.f32.mrb[0].mxu0
    %v667 = vadd.f32 %v586, %v666
    %v668 = vpop.f32.mrb[0].mxu0
    %669 = vdwg.mxu0
    %v671 = vlaneseq
    %v672 = vshrl.u32 %v671, 7
    %v673 = vsub.s32 0, %v672
    %v674 = vrot.slane %v483, %v673
    %vm676 = vcmask 64512
    %v678 = vsel %vm676, %v467, 0
    %680 = vmatprep.subr.mxu0 0.0
    %681 = vmatpush1.msra.mxu0 %v482
    %682 = vmatprep.subr.mxu0 0.0
    %683 = vmatpush1.msra.mxu0 0.0
    %684 = vmatprep.subr.mxu0 0.0
    %685 = vmatpush1.msra.mxu0 0.0
    %686 = vmatprep.subr.mxu0 0.0
    %687 = vmatpush1.msra.mxu0 0.0
    %688 = vmatprep.subr.mxu0 0.0
    %689 = vmatpush1.msra.mxu0 0.0
    %690 = vmatprep.subr.mxu0 0.0
    %691 = vmatpush1.msra.mxu0 0.0
    %692 = vmatprep.subr.mxu0 0.0
    %693 = vmatpush1.msra.mxu0 0.0
    %694 = vmatprep.subr.mxu0 0.0
    %695 = vmatpush1.msra.mxu0 0.0
    %696 = vmatprep.subr.mxu0 0.0
    %697 = vmatpush1.msra.mxu0 0.0
    %698 = vmatprep.subr.mxu0 0.0
    %699 = vmatpush1.msra.mxu0 0.0
    %700 = vmatprep.subr.mxu0 0.0
    %701 = vmatpush1.msra.mxu0 0.0
    %702 = vmatprep.subr.mxu0 0.0
    %703 = vmatpush1.msra.mxu0 0.0
    %704 = vmatprep.subr.mxu0 0.0
    %705 = vmatpush1.msra.mxu0 0.0
    %706 = vmatprep.subr.mxu0 0.0
    %707 = vmatpush1.msra.mxu0 0.0
    %708 = vmatprep.subr.mxu0 0.0
    %709 = vmatpush1.msra.mxu0 0.0
    %710 = vmatprep.subr.mxu0 0.0
    %711 = vmatpush1.msra.mxu0 0.0
    %712 = vmatprep.subr.mxu0 0.0
    %713 = vmatpush1.msra.mxu0 0.0
    %714 = vmatprep.subr.mxu0 0.0
    %715 = vmatpush1.msra.mxu0 0.0
    %716 = vmatprep.subr.mxu0 0.0
    %717 = vmatpush1.msra.mxu0 0.0
    %718 = vmatprep.subr.mxu0 0.0
    %719 = vmatpush1.msra.mxu0 0.0
    %720 = vmatprep.subr.mxu0 0.0
    %721 = vmatpush1.msra.mxu0 0.0
    %722 = vmatprep.subr.mxu0 0.0
    %723 = vmatpush1.msra.mxu0 0.0
    %724 = vmatprep.subr.mxu0 0.0
    %725 = vmatpush1.msra.mxu0 0.0
    %726 = vmatprep.subr.mxu0 0.0
    %727 = vmatpush1.msra.mxu0 0.0
    %728 = vmatprep.subr.mxu0 0.0
    %729 = vmatpush1.msra.mxu0 0.0
    %730 = vmatprep.subr.mxu0 0.0
    %731 = vmatpush1.msra.mxu0 0.0
    %732 = vmatprep.subr.mxu0 0.0
    %733 = vmatpush1.msra.mxu0 0.0
    %734 = vmatprep.subr.mxu0 0.0
    %735 = vmatpush1.msra.mxu0 0.0
    %736 = vmatprep.subr.mxu0 0.0
    %737 = vmatpush1.msra.mxu0 0.0
    %738 = vmatprep.subr.mxu0 0.0
    %739 = vmatpush1.msra.mxu0 0.0
    %740 = vmatprep.subr.mxu0 0.0
    %741 = vmatpush1.msra.mxu0 0.0
    %742 = vmatprep.subr.mxu0 0.0
    %743 = vmatpush1.msra.mxu0 0.0
    %744 = vmatprep.mubr.f32.mxu0 0.0
    %745 = vmatmul.mubr.f32.gmra.mrb[0].mxu0 %v678
    %v746 = vpop.f32.mrb[0].mxu0
    %v747 = vadd.f32 %v674, %v746
    %v748 = vpop.f32.mrb[0].mxu0
    %749 = vdwg.mxu0
    %v750 = vmax.f32 %v747, 0.0
    %v752 = vlaneseq
    %v753 = vshrl.u32 %v752, 7
    %v754 = vsub.s32 0, %v753
    %v755 = vrot.slane %v487, %v754
    %v758 = vsel %vm588, %v750, 0
    %760 = vmatprep.subr.mxu0 0.0
    %761 = vmatpush1.msra.mxu0 %v484
    %762 = vmatprep.subr.mxu0 0.0
    %763 = vmatpush1.msra.mxu0 %v485
    %764 = vmatprep.subr.mxu0 0.0
    %765 = vmatpush1.msra.mxu0 %v486
    %766 = vmatprep.subr.mxu0 0.0
    %767 = vmatpush1.msra.mxu0 0.0
    %768 = vmatprep.subr.mxu0 0.0
    %769 = vmatpush1.msra.mxu0 0.0
    %770 = vmatprep.subr.mxu0 0.0
    %771 = vmatpush1.msra.mxu0 0.0
    %772 = vmatprep.subr.mxu0 0.0
    %773 = vmatpush1.msra.mxu0 0.0
    %774 = vmatprep.subr.mxu0 0.0
    %775 = vmatpush1.msra.mxu0 0.0
    %776 = vmatprep.subr.mxu0 0.0
    %777 = vmatpush1.msra.mxu0 0.0
    %778 = vmatprep.subr.mxu0 0.0
    %779 = vmatpush1.msra.mxu0 0.0
    %780 = vmatprep.subr.mxu0 0.0
    %781 = vmatpush1.msra.mxu0 0.0
    %782 = vmatprep.subr.mxu0 0.0
    %783 = vmatpush1.msra.mxu0 0.0
    %784 = vmatprep.subr.mxu0 0.0
    %785 = vmatpush1.msra.mxu0 0.0
    %786 = vmatprep.subr.mxu0 0.0
    %787 = vmatpush1.msra.mxu0 0.0
    %788 = vmatprep.subr.mxu0 0.0
    %789 = vmatpush1.msra.mxu0 0.0
    %790 = vmatprep.subr.mxu0 0.0
    %791 = vmatpush1.msra.mxu0 0.0
    %792 = vmatprep.subr.mxu0 0.0
    %793 = vmatpush1.msra.mxu0 0.0
    %794 = vmatprep.subr.mxu0 0.0
    %795 = vmatpush1.msra.mxu0 0.0
    %796 = vmatprep.subr.mxu0 0.0
    %797 = vmatpush1.msra.mxu0 0.0
    %798 = vmatprep.subr.mxu0 0.0
    %799 = vmatpush1.msra.mxu0 0.0
    %800 = vmatprep.subr.mxu0 0.0
    %801 = vmatpush1.msra.mxu0 0.0
    %802 = vmatprep.subr.mxu0 0.0
    %803 = vmatpush1.msra.mxu0 0.0
    %804 = vmatprep.subr.mxu0 0.0
    %805 = vmatpush1.msra.mxu0 0.0
    %806 = vmatprep.subr.mxu0 0.0
    %807 = vmatpush1.msra.mxu0 0.0
    %808 = vmatprep.subr.mxu0 0.0
    %809 = vmatpush1.msra.mxu0 0.0
    %810 = vmatprep.subr.mxu0 0.0
    %811 = vmatpush1.msra.mxu0 0.0
    %812 = vmatprep.subr.mxu0 0.0
    %813 = vmatpush1.msra.mxu0 0.0
    %814 = vmatprep.subr.mxu0 0.0
    %815 = vmatpush1.msra.mxu0 0.0
    %816 = vmatprep.subr.mxu0 0.0
    %817 = vmatpush1.msra.mxu0 0.0
    %818 = vmatprep.subr.mxu0 0.0
    %819 = vmatpush1.msra.mxu0 0.0
    %820 = vmatprep.subr.mxu0 0.0
    %821 = vmatpush1.msra.mxu0 0.0
    %822 = vmatprep.subr.mxu0 0.0
    %823 = vmatpush1.msra.mxu0 0.0
    %824 = vmatprep.mubr.f32.mxu0 0.0
    %825 = vmatmul.mubr.f32.gmra.mrb[0].mxu0 %v758
    %v826 = vpop.f32.mrb[0].mxu0
    %v827 = vadd.f32 %v755, %v826
    %v828 = vpop.f32.mrb[0].mxu0
    %829 = vdwg.mxu0
    %vm830 = vcmask 31744
    %v832 = vsel %vm830, %v474, 0
    %v835 = vsel %vm830, %v475, 0
    %vm837 = vcmask 1043456
    %v839 = vsel %vm837, %v827, 0
    %841 = vmatprep.subr.mxu0 0.0
    %842 = vmatpush1.msra.mxu0 %v839
    %843 = vmatprep.subr.mxu0 0.0
    %844 = vmatpush1.msra.mxu0 0.0
    %845 = vmatprep.subr.mxu0 0.0
    %846 = vmatpush1.msra.mxu0 0.0
    %847 = vmatprep.subr.mxu0 0.0
    %848 = vmatpush1.msra.mxu0 0.0
    %849 = vmatprep.subr.mxu0 0.0
    %850 = vmatpush1.msra.mxu0 0.0
    %851 = vmatprep.subr.mxu0 0.0
    %852 = vmatpush1.msra.mxu0 0.0
    %853 = vmatprep.subr.mxu0 0.0
    %854 = vmatpush1.msra.mxu0 0.0
    %855 = vmatprep.subr.mxu0 0.0
    %856 = vmatpush1.msra.mxu0 0.0
    %857 = vmatprep.subr.mxu0 0.0
    %858 = vmatpush1.msra.mxu0 0.0
    %859 = vmatprep.subr.mxu0 0.0
    %860 = vmatpush1.msra.mxu0 0.0
    %861 = vmatprep.subr.mxu0 0.0
    %862 = vmatpush1.msra.mxu0 0.0
    %863 = vmatprep.subr.mxu0 0.0
    %864 = vmatpush1.msra.mxu0 0.0
    %865 = vmatprep.subr.mxu0 0.0
    %866 = vmatpush1.msra.mxu0 0.0
    %867 = vmatprep.subr.mxu0 0.0
    %868 = vmatpush1.msra.mxu0 0.0
    %869 = vmatprep.subr.mxu0 0.0
    %870 = vmatpush1.msra.mxu0 0.0
    %871 = vmatprep.subr.mxu0 0.0
    %872 = vmatpush1.msra.mxu0 0.0
    %873 = vmatprep.subr.mxu0 0.0
    %874 = vmatpush1.msra.mxu0 0.0
    %875 = vmatprep.subr.mxu0 0.0
    %876 = vmatpush1.msra.mxu0 0.0
    %877 = vmatprep.subr.mxu0 0.0
    %878 = vmatpush1.msra.mxu0 0.0
    %879 = vmatprep.subr.mxu0 0.0
    %880 = vmatpush1.msra.mxu0 0.0
    %881 = vmatprep.subr.mxu0 0.0
    %882 = vmatpush1.msra.mxu0 0.0
    %883 = vmatprep.subr.mxu0 0.0
    %884 = vmatpush1.msra.mxu0 0.0
    %885 = vmatprep.subr.mxu0 0.0
    %886 = vmatpush1.msra.mxu0 0.0
    %887 = vmatprep.subr.mxu0 0.0
    %888 = vmatpush1.msra.mxu0 0.0
    %889 = vmatprep.subr.mxu0 0.0
    %890 = vmatpush1.msra.mxu0 0.0
    %891 = vmatprep.subr.mxu0 0.0
    %892 = vmatpush1.msra.mxu0 0.0
    %893 = vmatprep.subr.mxu0 0.0
    %894 = vmatpush1.msra.mxu0 0.0
    %895 = vmatprep.subr.mxu0 0.0
    %896 = vmatpush1.msra.mxu0 0.0
    %897 = vmatprep.subr.mxu0 0.0
    %898 = vmatpush1.msra.mxu0 0.0
    %899 = vmatprep.subr.mxu0 0.0
    %900 = vmatpush1.msra.mxu0 0.0
    %901 = vmatprep.subr.mxu0 0.0
    %902 = vmatpush1.msra.mxu0 0.0
    %903 = vmatprep.subr.mxu0 0.0
    %904 = vmatpush1.msra.mxu0 0.0
    %905 = vmatprep.mubr.f32.mxu0 0.0
    %906 = vmatmul.mubr.f32.gmra.mrb[0].mxu0 %v832
    %v907 = vpop.f32.mrb[0].mxu0
    %v908 = vadd.f32 0.0, %v907
    %v909 = vpop.f32.mrb[0].mxu0
    %910 = vmatprep.mubr.f32.mxu0 0.0
    %911 = vmatmul.mubr.f32.gmra.mrb[0].mxu0 %v835
    %v912 = vpop.f32.mrb[0].mxu0
    %v913 = vadd.f32 0.0, %v912
    %v914 = vpop.f32.mrb[0].mxu0
    %915 = vdwg.mxu0
    %vm916 = vcmask 80896
    %v918 = vsel %vm916, %v468, 0
    %v921 = vsel %vm916, %v469, 0
    %vm923 = vcmask 1041408
    %v925 = vsel %vm923, %v667, 0
    %927 = vmatprep.subr.mxu0 0.0
    %928 = vmatpush1.msra.mxu0 %v662
    %929 = vmatprep.subr.mxu0 0.0
    %930 = vmatpush1.msra.mxu0 %v925
    %931 = vmatprep.subr.mxu0 0.0
    %932 = vmatpush1.msra.mxu0 0.0
    %933 = vmatprep.subr.mxu0 0.0
    %934 = vmatpush1.msra.mxu0 0.0
    %935 = vmatprep.subr.mxu0 0.0
    %936 = vmatpush1.msra.mxu0 0.0
    %937 = vmatprep.subr.mxu0 0.0
    %938 = vmatpush1.msra.mxu0 0.0
    %939 = vmatprep.subr.mxu0 0.0
    %940 = vmatpush1.msra.mxu0 0.0
    %941 = vmatprep.subr.mxu0 0.0
    %942 = vmatpush1.msra.mxu0 0.0
    %943 = vmatprep.subr.mxu0 0.0
    %944 = vmatpush1.msra.mxu0 0.0
    %945 = vmatprep.subr.mxu0 0.0
    %946 = vmatpush1.msra.mxu0 0.0
    %947 = vmatprep.subr.mxu0 0.0
    %948 = vmatpush1.msra.mxu0 0.0
    %949 = vmatprep.subr.mxu0 0.0
    %950 = vmatpush1.msra.mxu0 0.0
    %951 = vmatprep.subr.mxu0 0.0
    %952 = vmatpush1.msra.mxu0 0.0
    %953 = vmatprep.subr.mxu0 0.0
    %954 = vmatpush1.msra.mxu0 0.0
    %955 = vmatprep.subr.mxu0 0.0
    %956 = vmatpush1.msra.mxu0 0.0
    %957 = vmatprep.subr.mxu0 0.0
    %958 = vmatpush1.msra.mxu0 0.0
    %959 = vmatprep.subr.mxu0 0.0
    %960 = vmatpush1.msra.mxu0 0.0
    %961 = vmatprep.subr.mxu0 0.0
    %962 = vmatpush1.msra.mxu0 0.0
    %963 = vmatprep.subr.mxu0 0.0
    %964 = vmatpush1.msra.mxu0 0.0
    %965 = vmatprep.subr.mxu0 0.0
    %966 = vmatpush1.msra.mxu0 0.0
    %967 = vmatprep.subr.mxu0 0.0
    %968 = vmatpush1.msra.mxu0 0.0
    %969 = vmatprep.subr.mxu0 0.0
    %970 = vmatpush1.msra.mxu0 0.0
    %971 = vmatprep.subr.mxu0 0.0
    %972 = vmatpush1.msra.mxu0 0.0
    %973 = vmatprep.subr.mxu0 0.0
    %974 = vmatpush1.msra.mxu0 0.0
    %975 = vmatprep.subr.mxu0 0.0
    %976 = vmatpush1.msra.mxu0 0.0
    %977 = vmatprep.subr.mxu0 0.0
    %978 = vmatpush1.msra.mxu0 0.0
    %979 = vmatprep.subr.mxu0 0.0
    %980 = vmatpush1.msra.mxu0 0.0
    %981 = vmatprep.subr.mxu0 0.0
    %982 = vmatpush1.msra.mxu0 0.0
    %983 = vmatprep.subr.mxu0 0.0
    %984 = vmatpush1.msra.mxu0 0.0
    %985 = vmatprep.subr.mxu0 0.0
    %986 = vmatpush1.msra.mxu0 0.0
    %987 = vmatprep.subr.mxu0 0.0
    %988 = vmatpush1.msra.mxu0 0.0
    %989 = vmatprep.subr.mxu0 0.0
    %990 = vmatpush1.msra.mxu0 0.0
    %991 = vmatprep.mubr.f32.mxu0 0.0
    %992 = vmatmul.mubr.f32.gmra.mrb[0].mxu0 %v918
    %v993 = vpop.f32.mrb[0].mxu0
    %v994 = vadd.f32 %v908, %v993
    %v995 = vpop.f32.mrb[0].mxu0
    %996 = vmatprep.mubr.f32.mxu0 0.0
    %997 = vmatmul.mubr.f32.gmra.mrb[0].mxu0 %v921
    %v998 = vpop.f32.mrb[0].mxu0
    %v999 = vadd.f32 %v913, %v998
    %v1000 = vpop.f32.mrb[0].mxu0
    %1001 = vdwg.mxu0
    %v1002 = vld [vmem:[%s85] sm:$0x3f]
    %v1003 = vld [vmem:[#allocation7] sm:$0x1]
    %v1004 = vld [vmem:[%s89] sm:$0xff]
    %v1005 = vld [vmem:[%s89 + $0x8] sm:$0xff]
    %v1006 = vld [vmem:[%s89 + $0x10] sm:$0xff]
    %v1007 = vld [vmem:[#allocation8] sm:$0x1]
    %v1008 = vld [vmem:[%s93] sm:$0x3f]
    %v1009 = vld [vmem:[%s95] sm:$0x3f]
    %v1010 = vld [vmem:[#allocation10] sm:$0x1]
    %v1011 = vld [vmem:[%s99] sm:$0xff]
    %v1012 = vld [vmem:[%s99 + $0x8] sm:$0xff]
    %v1013 = vld [vmem:[%s99 + $0x10] sm:$0xff]
    %v1014 = vld [vmem:[#allocation11] sm:$0x1]
    %v1016 = vlaneseq
    %v1017 = vshrl.u32 %v1016, 7
    %v1018 = vsub.s32 0, %v1017
    %v1019 = vrot.slane %v1003, %v1018
    %v1022 = vsel %vm494, %v994, 0
    %v1025 = vsel %vm494, %v999, 0
    %v1028 = vsel %vm501, %v1002, 0
    %1030 = vmatprep.subr.mxu0 0.0
    %1031 = vmatpush1.msra.mxu0 %v1028
    %1032 = vmatprep.subr.mxu0 0.0
    %1033 = vmatpush1.msra.mxu0 0.0
    %1034 = vmatprep.subr.mxu0 0.0
    %1035 = vmatpush1.msra.mxu0 0.0
    %1036 = vmatprep.subr.mxu0 0.0
    %1037 = vmatpush1.msra.mxu0 0.0
    %1038 = vmatprep.subr.mxu0 0.0
    %1039 = vmatpush1.msra.mxu0 0.0
    %1040 = vmatprep.subr.mxu0 0.0
    %1041 = vmatpush1.msra.mxu0 0.0
    %1042 = vmatprep.subr.mxu0 0.0
    %1043 = vmatpush1.msra.mxu0 0.0
    %1044 = vmatprep.subr.mxu0 0.0
    %1045 = vmatpush1.msra.mxu0 0.0
    %1046 = vmatprep.subr.mxu0 0.0
    %1047 = vmatpush1.msra.mxu0 0.0
    %1048 = vmatprep.subr.mxu0 0.0
    %1049 = vmatpush1.msra.mxu0 0.0
    %1050 = vmatprep.subr.mxu0 0.0
    %1051 = vmatpush1.msra.mxu0 0.0
    %1052 = vmatprep.subr.mxu0 0.0
    %1053 = vmatpush1.msra.mxu0 0.0
    %1054 = vmatprep.subr.mxu0 0.0
    %1055 = vmatpush1.msra.mxu0 0.0
    %1056 = vmatprep.subr.mxu0 0.0
    %1057 = vmatpush1.msra.mxu0 0.0
    %1058 = vmatprep.subr.mxu0 0.0
    %1059 = vmatpush1.msra.mxu0 0.0
    %1060 = vmatprep.subr.mxu0 0.0
    %1061 = vmatpush1.msra.mxu0 0.0
    %1062 = vmatprep.subr.mxu0 0.0
    %1063 = vmatpush1.msra.mxu0 0.0
    %1064 = vmatprep.subr.mxu0 0.0
    %1065 = vmatpush1.msra.mxu0 0.0
    %1066 = vmatprep.subr.mxu0 0.0
    %1067 = vmatpush1.msra.mxu0 0.0
    %1068 = vmatprep.subr.mxu0 0.0
    %1069 = vmatpush1.msra.mxu0 0.0
    %1070 = vmatprep.subr.mxu0 0.0
    %1071 = vmatpush1.msra.mxu0 0.0
    %1072 = vmatprep.subr.mxu0 0.0
    %1073 = vmatpush1.msra.mxu0 0.0
    %1074 = vmatprep.subr.mxu0 0.0
    %1075 = vmatpush1.msra.mxu0 0.0
    %1076 = vmatprep.subr.mxu0 0.0
    %1077 = vmatpush1.msra.mxu0 0.0
    %1078 = vmatprep.subr.mxu0 0.0
    %1079 = vmatpush1.msra.mxu0 0.0
    %1080 = vmatprep.subr.mxu0 0.0
    %1081 = vmatpush1.msra.mxu0 0.0
    %1082 = vmatprep.subr.mxu0 0.0
    %1083 = vmatpush1.msra.mxu0 0.0
    %1084 = vmatprep.subr.mxu0 0.0
    %1085 = vmatpush1.msra.mxu0 0.0
    %1086 = vmatprep.subr.mxu0 0.0
    %1087 = vmatpush1.msra.mxu0 0.0
    %1088 = vmatprep.subr.mxu0 0.0
    %1089 = vmatpush1.msra.mxu0 0.0
    %1090 = vmatprep.subr.mxu0 0.0
    %1091 = vmatpush1.msra.mxu0 0.0
    %1092 = vmatprep.subr.mxu0 0.0
    %1093 = vmatpush1.msra.mxu0 0.0
    %1094 = vmatprep.mubr.f32.mxu0 0.0
    %1095 = vmatmul.mubr.f32.gmra.mrb[0].mxu0 %v1022
    %v1096 = vpop.f32.mrb[0].mxu0
    %v1097 = vadd.f32 %v1019, %v1096
    %v1098 = vpop.f32.mrb[0].mxu0
    %1099 = vmatprep.mubr.f32.mxu0 0.0
    %1100 = vmatmul.mubr.f32.gmra.mrb[0].mxu0 %v1025
    %v1101 = vpop.f32.mrb[0].mxu0
    %v1102 = vadd.f32 %v1019, %v1101
    %v1103 = vpop.f32.mrb[0].mxu0
    %1104 = vdwg.mxu0
    %v1105 = vmax.f32 %v1097, 0.0
    %v1106 = vmax.f32 %v1102, 0.0
    %v1108 = vlaneseq
    %v1109 = vshrl.u32 %v1108, 7
    %v1110 = vsub.s32 0, %v1109
    %v1111 = vrot.slane %v1007, %v1110
    %v1114 = vsel %vm588, %v1105, 0
    %v1117 = vsel %vm588, %v1106, 0
    %1119 = vmatprep.subr.mxu0 0.0
    %1120 = vmatpush1.msra.mxu0 %v1004
    %1121 = vmatprep.subr.mxu0 0.0
    %1122 = vmatpush1.msra.mxu0 %v1005
    %1123 = vmatprep.subr.mxu0 0.0
    %1124 = vmatpush1.msra.mxu0 %v1006
    %1125 = vmatprep.subr.mxu0 0.0
    %1126 = vmatpush1.msra.mxu0 0.0
    %1127 = vmatprep.subr.mxu0 0.0
    %1128 = vmatpush1.msra.mxu0 0.0
    %1129 = vmatprep.subr.mxu0 0.0
    %1130 = vmatpush1.msra.mxu0 0.0
    %1131 = vmatprep.subr.mxu0 0.0
    %1132 = vmatpush1.msra.mxu0 0.0
    %1133 = vmatprep.subr.mxu0 0.0
    %1134 = vmatpush1.msra.mxu0 0.0
    %1135 = vmatprep.subr.mxu0 0.0
    %1136 = vmatpush1.msra.mxu0 0.0
    %1137 = vmatprep.subr.mxu0 0.0
    %1138 = vmatpush1.msra.mxu0 0.0
    %1139 = vmatprep.subr.mxu0 0.0
    %1140 = vmatpush1.msra.mxu0 0.0
    %1141 = vmatprep.subr.mxu0 0.0
    %1142 = vmatpush1.msra.mxu0 0.0
    %1143 = vmatprep.subr.mxu0 0.0
    %1144 = vmatpush1.msra.mxu0 0.0
    %1145 = vmatprep.subr.mxu0 0.0
    %1146 = vmatpush1.msra.mxu0 0.0
    %1147 = vmatprep.subr.mxu0 0.0
    %1148 = vmatpush1.msra.mxu0 0.0
    %1149 = vmatprep.subr.mxu0 0.0
    %1150 = vmatpush1.msra.mxu0 0.0
    %1151 = vmatprep.subr.mxu0 0.0
    %1152 = vmatpush1.msra.mxu0 0.0
    %1153 = vmatprep.subr.mxu0 0.0
    %1154 = vmatpush1.msra.mxu0 0.0
    %1155 = vmatprep.subr.mxu0 0.0
    %1156 = vmatpush1.msra.mxu0 0.0
    %1157 = vmatprep.subr.mxu0 0.0
    %1158 = vmatpush1.msra.mxu0 0.0
    %1159 = vmatprep.subr.mxu0 0.0
    %1160 = vmatpush1.msra.mxu0 0.0
    %1161 = vmatprep.subr.mxu0 0.0
    %1162 = vmatpush1.msra.mxu0 0.0
    %1163 = vmatprep.subr.mxu0 0.0
    %1164 = vmatpush1.msra.mxu0 0.0
    %1165 = vmatprep.subr.mxu0 0.0
    %1166 = vmatpush1.msra.mxu0 0.0
    %1167 = vmatprep.subr.mxu0 0.0
    %1168 = vmatpush1.msra.mxu0 0.0
    %1169 = vmatprep.subr.mxu0 0.0
    %1170 = vmatpush1.msra.mxu0 0.0
    %1171 = vmatprep.subr.mxu0 0.0
    %1172 = vmatpush1.msra.mxu0 0.0
    %1173 = vmatprep.subr.mxu0 0.0
    %1174 = vmatpush1.msra.mxu0 0.0
    %1175 = vmatprep.subr.mxu0 0.0
    %1176 = vmatpush1.msra.mxu0 0.0
    %1177 = vmatprep.subr.mxu0 0.0
    %1178 = vmatpush1.msra.mxu0 0.0
    %1179 = vmatprep.subr.mxu0 0.0
    %1180 = vmatpush1.msra.mxu0 0.0
    %1181 = vmatprep.subr.mxu0 0.0
    %1182 = vmatpush1.msra.mxu0 0.0
    %1183 = vmatprep.mubr.f32.mxu0 0.0
    %1184 = vmatmul.mubr.f32.gmra.mrb[0].mxu0 %v1114
    %v1185 = vpop.f32.mrb[0].mxu0
    %v1186 = vadd.f32 %v1111, %v1185
    %v1187 = vpop.f32.mrb[0].mxu0
    %1188 = vmatprep.mubr.f32.mxu0 0.0
    %1189 = vmatmul.mubr.f32.gmra.mrb[0].mxu0 %v1117
    %v1190 = vpop.f32.mrb[0].mxu0
    %v1191 = vadd.f32 %v1111, %v1190
    %v1192 = vpop.f32.mrb[0].mxu0
    %1193 = vdwg.mxu0
    %vm1194 = vcmask 97280
    %v1196 = vsel %vm1194, %v470, 0
    %v1199 = vsel %vm1194, %v471, 0
    %v1202 = vsel %vm837, %v1191, 0
    %1204 = vmatprep.subr.mxu0 0.0
    %1205 = vmatpush1.msra.mxu0 %v1186
    %1206 = vmatprep.subr.mxu0 0.0
    %1207 = vmatpush1.msra.mxu0 %v1202
    %1208 = vmatprep.subr.mxu0 0.0
    %1209 = vmatpush1.msra.mxu0 0.0
    %1210 = vmatprep.subr.mxu0 0.0
    %1211 = vmatpush1.msra.mxu0 0.0
    %1212 = vmatprep.subr.mxu0 0.0
    %1213 = vmatpush1.msra.mxu0 0.0
    %1214 = vmatprep.subr.mxu0 0.0
    %1215 = vmatpush1.msra.mxu0 0.0
    %1216 = vmatprep.subr.mxu0 0.0
    %1217 = vmatpush1.msra.mxu0 0.0
    %1218 = vmatprep.subr.mxu0 0.0
    %1219 = vmatpush1.msra.mxu0 0.0
    %1220 = vmatprep.subr.mxu0 0.0
    %1221 = vmatpush1.msra.mxu0 0.0
    %1222 = vmatprep.subr.mxu0 0.0
    %1223 = vmatpush1.msra.mxu0 0.0
    %1224 = vmatprep.subr.mxu0 0.0
    %1225 = vmatpush1.msra.mxu0 0.0
    %1226 = vmatprep.subr.mxu0 0.0
    %1227 = vmatpush1.msra.mxu0 0.0
    %1228 = vmatprep.subr.mxu0 0.0
    %1229 = vmatpush1.msra.mxu0 0.0
    %1230 = vmatprep.subr.mxu0 0.0
    %1231 = vmatpush1.msra.mxu0 0.0
    %1232 = vmatprep.subr.mxu0 0.0
    %1233 = vmatpush1.msra.mxu0 0.0
    %1234 = vmatprep.subr.mxu0 0.0
    %1235 = vmatpush1.msra.mxu0 0.0
    %1236 = vmatprep.subr.mxu0 0.0
    %1237 = vmatpush1.msra.mxu0 0.0
    %1238 = vmatprep.subr.mxu0 0.0
    %1239 = vmatpush1.msra.mxu0 0.0
    %1240 = vmatprep.subr.mxu0 0.0
    %1241 = vmatpush1.msra.mxu0 0.0
    %1242 = vmatprep.subr.mxu0 0.0
    %1243 = vmatpush1.msra.mxu0 0.0
    %1244 = vmatprep.subr.mxu0 0.0
    %1245 = vmatpush1.msra.mxu0 0.0
    %1246 = vmatprep.subr.mxu0 0.0
    %1247 = vmatpush1.msra.mxu0 0.0
    %1248 = vmatprep.subr.mxu0 0.0
    %1249 = vmatpush1.msra.mxu0 0.0
    %1250 = vmatprep.subr.mxu0 0.0
    %1251 = vmatpush1.msra.mxu0 0.0
    %1252 = vmatprep.subr.mxu0 0.0
    %1253 = vmatpush1.msra.mxu0 0.0
    %1254 = vmatprep.subr.mxu0 0.0
    %1255 = vmatpush1.msra.mxu0 0.0
    %1256 = vmatprep.subr.mxu0 0.0
    %1257 = vmatpush1.msra.mxu0 0.0
    %1258 = vmatprep.subr.mxu0 0.0
    %1259 = vmatpush1.msra.mxu0 0.0
    %1260 = vmatprep.subr.mxu0 0.0
    %1261 = vmatpush1.msra.mxu0 0.0
    %1262 = vmatprep.subr.mxu0 0.0
    %1263 = vmatpush1.msra.mxu0 0.0
    %1264 = vmatprep.subr.mxu0 0.0
    %1265 = vmatpush1.msra.mxu0 0.0
    %1266 = vmatprep.subr.mxu0 0.0
    %1267 = vmatpush1.msra.mxu0 0.0
    %1268 = vmatprep.mubr.f32.mxu0 0.0
    %1269 = vmatmul.mubr.f32.gmra.mrb[0].mxu0 %v1196
    %v1270 = vpop.f32.mrb[0].mxu0
    %v1271 = vadd.f32 0.0, %v1270
    %v1272 = vpop.f32.mrb[0].mxu0
    %1273 = vmatprep.mubr.f32.mxu0 0.0
    %1274 = vmatmul.mubr.f32.gmra.mrb[0].mxu0 %v1199
    %v1275 = vpop.f32.mrb[0].mxu0
    %v1276 = vadd.f32 0.0, %v1275
    %v1277 = vpop.f32.mrb[0].mxu0
    %1278 = vdwg.mxu0
    %v1280 = vsel %vm1194, %v472, 0
    %v1283 = vsel %vm1194, %v473, 0
    %1285 = vmatprep.subr.mxu0 0.0
    %1286 = vmatpush1.msra.mxu0 %v1186
    %1287 = vmatprep.subr.mxu0 0.0
    %1288 = vmatpush1.msra.mxu0 %v1202
    %1289 = vmatprep.subr.mxu0 0.0
    %1290 = vmatpush1.msra.mxu0 0.0
    %1291 = vmatprep.subr.mxu0 0.0
    %1292 = vmatpush1.msra.mxu0 0.0
    %1293 = vmatprep.subr.mxu0 0.0
    %1294 = vmatpush1.msra.mxu0 0.0
    %1295 = vmatprep.subr.mxu0 0.0
    %1296 = vmatpush1.msra.mxu0 0.0
    %1297 = vmatprep.subr.mxu0 0.0
    %1298 = vmatpush1.msra.mxu0 0.0
    %1299 = vmatprep.subr.mxu0 0.0
    %1300 = vmatpush1.msra.mxu0 0.0
    %1301 = vmatprep.subr.mxu0 0.0
    %1302 = vmatpush1.msra.mxu0 0.0
    %1303 = vmatprep.subr.mxu0 0.0
    %1304 = vmatpush1.msra.mxu0 0.0
    %1305 = vmatprep.subr.mxu0 0.0
    %1306 = vmatpush1.msra.mxu0 0.0
    %1307 = vmatprep.subr.mxu0 0.0
    %1308 = vmatpush1.msra.mxu0 0.0
    %1309 = vmatprep.subr.mxu0 0.0
    %1310 = vmatpush1.msra.mxu0 0.0
    %1311 = vmatprep.subr.mxu0 0.0
    %1312 = vmatpush1.msra.mxu0 0.0
    %1313 = vmatprep.subr.mxu0 0.0
    %1314 = vmatpush1.msra.mxu0 0.0
    %1315 = vmatprep.subr.mxu0 0.0
    %1316 = vmatpush1.msra.mxu0 0.0
    %1317 = vmatprep.subr.mxu0 0.0
    %1318 = vmatpush1.msra.mxu0 0.0
    %1319 = vmatprep.subr.mxu0 0.0
    %1320 = vmatpush1.msra.mxu0 0.0
    %1321 = vmatprep.subr.mxu0 0.0
    %1322 = vmatpush1.msra.mxu0 0.0
    %1323 = vmatprep.subr.mxu0 0.0
    %1324 = vmatpush1.msra.mxu0 0.0
    %1325 = vmatprep.subr.mxu0 0.0
    %1326 = vmatpush1.msra.mxu0 0.0
    %1327 = vmatprep.subr.mxu0 0.0
    %1328 = vmatpush1.msra.mxu0 0.0
    %1329 = vmatprep.subr.mxu0 0.0
    %1330 = vmatpush1.msra.mxu0 0.0
    %1331 = vmatprep.subr.mxu0 0.0
    %1332 = vmatpush1.msra.mxu0 0.0
    %1333 = vmatprep.subr.mxu0 0.0
    %1334 = vmatpush1.msra.mxu0 0.0
    %1335 = vmatprep.subr.mxu0 0.0
    %1336 = vmatpush1.msra.mxu0 0.0
    %1337 = vmatprep.subr.mxu0 0.0
    %1338 = vmatpush1.msra.mxu0 0.0
    %1339 = vmatprep.subr.mxu0 0.0
    %1340 = vmatpush1.msra.mxu0 0.0
    %1341 = vmatprep.subr.mxu0 0.0
    %1342 = vmatpush1.msra.mxu0 0.0
    %1343 = vmatprep.subr.mxu0 0.0
    %1344 = vmatpush1.msra.mxu0 0.0
    %1345 = vmatprep.subr.mxu0 0.0
    %1346 = vmatpush1.msra.mxu0 0.0
    %1347 = vmatprep.subr.mxu0 0.0
    %1348 = vmatpush1.msra.mxu0 0.0
    %1349 = vmatprep.mubr.f32.mxu0 0.0
    %1350 = vmatmul.mubr.f32.gmra.mrb[0].mxu0 %v1280
    %v1351 = vpop.f32.mrb[0].mxu0
    %v1352 = vadd.f32 0.0, %v1351
    %v1353 = vpop.f32.mrb[0].mxu0
    %1354 = vmatprep.mubr.f32.mxu0 0.0
    %1355 = vmatmul.mubr.f32.gmra.mrb[0].mxu0 %v1283
    %v1356 = vpop.f32.mrb[0].mxu0
    %v1357 = vadd.f32 0.0, %v1356
    %v1358 = vpop.f32.mrb[0].mxu0
    %1359 = vdwg.mxu0
    %v1361 = vsel %vm494, %v1352, 0
    %v1364 = vsel %vm494, %v1357, 0
    %v1367 = vsel %vm501, %v1009, 0
    %1369 = vmatprep.subr.mxu0 0.0
    %1370 = vmatpush1.msra.mxu0 %v1367
    %1371 = vmatprep.subr.mxu0 0.0
    %1372 = vmatpush1.msra.mxu0 0.0
    %1373 = vmatprep.subr.mxu0 0.0
    %1374 = vmatpush1.msra.mxu0 0.0
    %1375 = vmatprep.subr.mxu0 0.0
    %1376 = vmatpush1.msra.mxu0 0.0
    %1377 = vmatprep.subr.mxu0 0.0
    %1378 = vmatpush1.msra.mxu0 0.0
    %1379 = vmatprep.subr.mxu0 0.0
    %1380 = vmatpush1.msra.mxu0 0.0
    %1381 = vmatprep.subr.mxu0 0.0
    %1382 = vmatpush1.msra.mxu0 0.0
    %1383 = vmatprep.subr.mxu0 0.0
    %1384 = vmatpush1.msra.mxu0 0.0
    %1385 = vmatprep.subr.mxu0 0.0
    %1386 = vmatpush1.msra.mxu0 0.0
    %1387 = vmatprep.subr.mxu0 0.0
    %1388 = vmatpush1.msra.mxu0 0.0
    %1389 = vmatprep.subr.mxu0 0.0
    %1390 = vmatpush1.msra.mxu0 0.0
    %1391 = vmatprep.subr.mxu0 0.0
    %1392 = vmatpush1.msra.mxu0 0.0
    %1393 = vmatprep.subr.mxu0 0.0
    %1394 = vmatpush1.msra.mxu0 0.0
    %1395 = vmatprep.subr.mxu0 0.0
    %1396 = vmatpush1.msra.mxu0 0.0
    %1397 = vmatprep.subr.mxu0 0.0
    %1398 = vmatpush1.msra.mxu0 0.0
    %1399 = vmatprep.subr.mxu0 0.0
    %1400 = vmatpush1.msra.mxu0 0.0
    %1401 = vmatprep.subr.mxu0 0.0
    %1402 = vmatpush1.msra.mxu0 0.0
    %1403 = vmatprep.subr.mxu0 0.0
    %1404 = vmatpush1.msra.mxu0 0.0
    %1405 = vmatprep.subr.mxu0 0.0
    %1406 = vmatpush1.msra.mxu0 0.0
    %1407 = vmatprep.subr.mxu0 0.0
    %1408 = vmatpush1.msra.mxu0 0.0
    %1409 = vmatprep.subr.mxu0 0.0
    %1410 = vmatpush1.msra.mxu0 0.0
    %1411 = vmatprep.subr.mxu0 0.0
    %1412 = vmatpush1.msra.mxu0 0.0
    %1413 = vmatprep.subr.mxu0 0.0
    %1414 = vmatpush1.msra.mxu0 0.0
    %1415 = vmatprep.subr.mxu0 0.0
    %1416 = vmatpush1.msra.mxu0 0.0
    %1417 = vmatprep.subr.mxu0 0.0
    %1418 = vmatpush1.msra.mxu0 0.0
    %1419 = vmatprep.subr.mxu0 0.0
    %1420 = vmatpush1.msra.mxu0 0.0
    %1421 = vmatprep.subr.mxu0 0.0
    %1422 = vmatpush1.msra.mxu0 0.0
    %1423 = vmatprep.subr.mxu0 0.0
    %1424 = vmatpush1.msra.mxu0 0.0
    %1425 = vmatprep.subr.mxu0 0.0
    %1426 = vmatpush1.msra.mxu0 0.0
    %1427 = vmatprep.subr.mxu0 0.0
    %1428 = vmatpush1.msra.mxu0 0.0
    %1429 = vmatprep.subr.mxu0 0.0
    %1430 = vmatpush1.msra.mxu0 0.0
    %1431 = vmatprep.subr.mxu0 0.0
    %1432 = vmatpush1.msra.mxu0 0.0
    %1433 = vmatprep.mubr.f32.mxu0 0.0
    %1434 = vmatmul.mubr.f32.gmra.mrb[0].mxu0 %v1361
    %v1435 = vpop.f32.mrb[0].mxu0
    %v1436 = vadd.f32 0.0, %v1435
    %v1437 = vpop.f32.mrb[0].mxu0
    %1438 = vmatprep.mubr.f32.mxu0 0.0
    %1439 = vmatmul.mubr.f32.gmra.mrb[0].mxu0 %v1364
    %v1440 = vpop.f32.mrb[0].mxu0
    %v1441 = vadd.f32 0.0, %v1440
    %v1442 = vpop.f32.mrb[0].mxu0
    %1443 = vdwg.mxu0
    %v1445 = vsel %vm494, %v1271, 0
    %v1448 = vsel %vm494, %v1276, 0
    %v1451 = vsel %vm501, %v1008, 0
    %1453 = vmatprep.subr.mxu0 0.0
    %1454 = vmatpush1.msra.mxu0 %v1451
    %1455 = vmatprep.subr.mxu0 0.0
    %1456 = vmatpush1.msra.mxu0 0.0
    %1457 = vmatprep.subr.mxu0 0.0
    %1458 = vmatpush1.msra.mxu0 0.0
    %1459 = vmatprep.subr.mxu0 0.0
    %1460 = vmatpush1.msra.mxu0 0.0
    %1461 = vmatprep.subr.mxu0 0.0
    %1462 = vmatpush1.msra.mxu0 0.0
    %1463 = vmatprep.subr.mxu0 0.0
    %1464 = vmatpush1.msra.mxu0 0.0
    %1465 = vmatprep.subr.mxu0 0.0
    %1466 = vmatpush1.msra.mxu0 0.0
    %1467 = vmatprep.subr.mxu0 0.0
    %1468 = vmatpush1.msra.mxu0 0.0
    %1469 = vmatprep.subr.mxu0 0.0
    %1470 = vmatpush1.msra.mxu0 0.0
    %1471 = vmatprep.subr.mxu0 0.0
    %1472 = vmatpush1.msra.mxu0 0.0
    %1473 = vmatprep.subr.mxu0 0.0
    %1474 = vmatpush1.msra.mxu0 0.0
    %1475 = vmatprep.subr.mxu0 0.0
    %1476 = vmatpush1.msra.mxu0 0.0
    %1477 = vmatprep.subr.mxu0 0.0
    %1478 = vmatpush1.msra.mxu0 0.0
    %1479 = vmatprep.subr.mxu0 0.0
    %1480 = vmatpush1.msra.mxu0 0.0
    %1481 = vmatprep.subr.mxu0 0.0
    %1482 = vmatpush1.msra.mxu0 0.0
    %1483 = vmatprep.subr.mxu0 0.0
    %1484 = vmatpush1.msra.mxu0 0.0
    %1485 = vmatprep.subr.mxu0 0.0
    %1486 = vmatpush1.msra.mxu0 0.0
    %1487 = vmatprep.subr.mxu0 0.0
    %1488 = vmatpush1.msra.mxu0 0.0
    %1489 = vmatprep.subr.mxu0 0.0
    %1490 = vmatpush1.msra.mxu0 0.0
    %1491 = vmatprep.subr.mxu0 0.0
    %1492 = vmatpush1.msra.mxu0 0.0
    %1493 = vmatprep.subr.mxu0 0.0
    %1494 = vmatpush1.msra.mxu0 0.0
    %1495 = vmatprep.subr.mxu0 0.0
    %1496 = vmatpush1.msra.mxu0 0.0
    %1497 = vmatprep.subr.mxu0 0.0
    %1498 = vmatpush1.msra.mxu0 0.0
    %1499 = vmatprep.subr.mxu0 0.0
    %1500 = vmatpush1.msra.mxu0 0.0
    %1501 = vmatprep.subr.mxu0 0.0
    %1502 = vmatpush1.msra.mxu0 0.0
    %1503 = vmatprep.subr.mxu0 0.0
    %1504 = vmatpush1.msra.mxu0 0.0
    %1505 = vmatprep.subr.mxu0 0.0
    %1506 = vmatpush1.msra.mxu0 0.0
    %1507 = vmatprep.subr.mxu0 0.0
    %1508 = vmatpush1.msra.mxu0 0.0
    %1509 = vmatprep.subr.mxu0 0.0
    %1510 = vmatpush1.msra.mxu0 0.0
    %1511 = vmatprep.subr.mxu0 0.0
    %1512 = vmatpush1.msra.mxu0 0.0
    %1513 = vmatprep.subr.mxu0 0.0
    %1514 = vmatpush1.msra.mxu0 0.0
    %1515 = vmatprep.subr.mxu0 0.0
    %1516 = vmatpush1.msra.mxu0 0.0
    %1517 = vmatprep.mubr.f32.mxu0 0.0
    %1518 = vmatmul.mubr.f32.gmra.mrb[0].mxu0 %v1445
    %v1519 = vpop.f32.mrb[0].mxu0
    %v1520 = vadd.f32 %v1436, %v1519
    %v1521 = vpop.f32.mrb[0].mxu0
    %1522 = vmatprep.mubr.f32.mxu0 0.0
    %1523 = vmatmul.mubr.f32.gmra.mrb[0].mxu0 %v1448
    %v1524 = vpop.f32.mrb[0].mxu0
    %v1525 = vadd.f32 %v1441, %v1524
    %v1526 = vpop.f32.mrb[0].mxu0
    %1527 = vdwg.mxu0
    %v1529 = vlaneseq
    %v1530 = vshrl.u32 %v1529, 7
    %v1531 = vsub.s32 0, %v1530
    %v1532 = vrot.slane %v1010, %v1531
    %v1534 = vadd.f32 %v1520, %v1532
    %v1535 = vadd.f32 %v1525, %v1532
    %v1536 = vmax.f32 %v1534, 0.0
    %v1537 = vmax.f32 %v1535, 0.0
    %v1539 = vlaneseq
    %v1540 = vshrl.u32 %v1539, 7
    %v1541 = vsub.s32 0, %v1540
    %v1542 = vrot.slane %v1014, %v1541
    %v1545 = vsel %vm588, %v1536, 0
    %v1548 = vsel %vm588, %v1537, 0
    %1550 = vmatprep.subr.mxu0 0.0
    %1551 = vmatpush1.msra.mxu0 %v1011
    %1552 = vmatprep.subr.mxu0 0.0
    %1553 = vmatpush1.msra.mxu0 %v1012
    %1554 = vmatprep.subr.mxu0 0.0
    %1555 = vmatpush1.msra.mxu0 %v1013
    %1556 = vmatprep.subr.mxu0 0.0
    %1557 = vmatpush1.msra.mxu0 0.0
    %1558 = vmatprep.subr.mxu0 0.0
    %1559 = vmatpush1.msra.mxu0 0.0
    %1560 = vmatprep.subr.mxu0 0.0
    %1561 = vmatpush1.msra.mxu0 0.0
    %1562 = vmatprep.subr.mxu0 0.0
    %1563 = vmatpush1.msra.mxu0 0.0
    %1564 = vmatprep.subr.mxu0 0.0
    %1565 = vmatpush1.msra.mxu0 0.0
    %1566 = vmatprep.subr.mxu0 0.0
    %1567 = vmatpush1.msra.mxu0 0.0
    %1568 = vmatprep.subr.mxu0 0.0
    %1569 = vmatpush1.msra.mxu0 0.0
    %1570 = vmatprep.subr.mxu0 0.0
    %1571 = vmatpush1.msra.mxu0 0.0
    %1572 = vmatprep.subr.mxu0 0.0
    %1573 = vmatpush1.msra.mxu0 0.0
    %1574 = vmatprep.subr.mxu0 0.0
    %1575 = vmatpush1.msra.mxu0 0.0
    %1576 = vmatprep.subr.mxu0 0.0
    %1577 = vmatpush1.msra.mxu0 0.0
    %1578 = vmatprep.subr.mxu0 0.0
    %1579 = vmatpush1.msra.mxu0 0.0
    %1580 = vmatprep.subr.mxu0 0.0
    %1581 = vmatpush1.msra.mxu0 0.0
    %1582 = vmatprep.subr.mxu0 0.0
    %1583 = vmatpush1.msra.mxu0 0.0
    %1584 = vmatprep.subr.mxu0 0.0
    %1585 = vmatpush1.msra.mxu0 0.0
    %1586 = vmatprep.subr.mxu0 0.0
    %1587 = vmatpush1.msra.mxu0 0.0
    %1588 = vmatprep.subr.mxu0 0.0
    %1589 = vmatpush1.msra.mxu0 0.0
    %1590 = vmatprep.subr.mxu0 0.0
    %1591 = vmatpush1.msra.mxu0 0.0
    %1592 = vmatprep.subr.mxu0 0.0
    %1593 = vmatpush1.msra.mxu0 0.0
    %1594 = vmatprep.subr.mxu0 0.0
    %1595 = vmatpush1.msra.mxu0 0.0
    %1596 = vmatprep.subr.mxu0 0.0
    %1597 = vmatpush1.msra.mxu0 0.0
    %1598 = vmatprep.subr.mxu0 0.0
    %1599 = vmatpush1.msra.mxu0 0.0
    %1600 = vmatprep.subr.mxu0 0.0
    %1601 = vmatpush1.msra.mxu0 0.0
    %1602 = vmatprep.subr.mxu0 0.0
    %1603 = vmatpush1.msra.mxu0 0.0
    %1604 = vmatprep.subr.mxu0 0.0
    %1605 = vmatpush1.msra.mxu0 0.0
    %1606 = vmatprep.subr.mxu0 0.0
    %1607 = vmatpush1.msra.mxu0 0.0
    %1608 = vmatprep.subr.mxu0 0.0
    %1609 = vmatpush1.msra.mxu0 0.0
    %1610 = vmatprep.subr.mxu0 0.0
    %1611 = vmatpush1.msra.mxu0 0.0
    %1612 = vmatprep.subr.mxu0 0.0
    %1613 = vmatpush1.msra.mxu0 0.0
    %1614 = vmatprep.mubr.f32.mxu0 0.0
    %1615 = vmatmul.mubr.f32.gmra.mrb[0].mxu0 %v1545
    %v1616 = vpop.f32.mrb[0].mxu0
    %v1617 = vadd.f32 %v1542, %v1616
    %v1618 = vpop.f32.mrb[0].mxu0
    %1619 = vmatprep.mubr.f32.mxu0 0.0
    %1620 = vmatmul.mubr.f32.gmra.mrb[0].mxu0 %v1548
    %v1621 = vpop.f32.mrb[0].mxu0
    %v1622 = vadd.f32 %v1542, %v1621
    %v1623 = vpop.f32.mrb[0].mxu0
    %1624 = vdwg.mxu0
    %v1625 = vld [vmem:[%s135] sm:$0xff]
    %v1626 = vld [vmem:[%s135 + $0x8] sm:$0xf]
    %v1627 = vld [vmem:[#allocation25] sm:$0x1]
    %v1628 = vld [vmem:[%s139] sm:$0xff]
    %v1629 = vld [vmem:[%s139 + $0x8] sm:$0xff]
    %v1630 = vld [vmem:[%s139 + $0x10] sm:$0xff]
    %v1631 = vld [vmem:[#allocation2] sm:$0x1]
    %v1633 = vlaneseq
    %v1634 = vshrl.u32 %v1633, 7
    %v1635 = vsub.s32 0, %v1634
    %v1636 = vrot.slane %v1627, %v1635
    %v1639 = vsel %vm1194, %v1617, 0
    %v1642 = vsel %vm1194, %v1622, 0
    %v1645 = vsel %vm837, %v1626, 0
    %1647 = vmatprep.subr.mxu0 0.0
    %1648 = vmatpush1.msra.mxu0 %v1625
    %1649 = vmatprep.subr.mxu0 0.0
    %1650 = vmatpush1.msra.mxu0 %v1645
    %1651 = vmatprep.subr.mxu0 0.0
    %1652 = vmatpush1.msra.mxu0 0.0
    %1653 = vmatprep.subr.mxu0 0.0
    %1654 = vmatpush1.msra.mxu0 0.0
    %1655 = vmatprep.subr.mxu0 0.0
    %1656 = vmatpush1.msra.mxu0 0.0
    %1657 = vmatprep.subr.mxu0 0.0
    %1658 = vmatpush1.msra.mxu0 0.0
    %1659 = vmatprep.subr.mxu0 0.0
    %1660 = vmatpush1.msra.mxu0 0.0
    %1661 = vmatprep.subr.mxu0 0.0
    %1662 = vmatpush1.msra.mxu0 0.0
    %1663 = vmatprep.subr.mxu0 0.0
    %1664 = vmatpush1.msra.mxu0 0.0
    %1665 = vmatprep.subr.mxu0 0.0
    %1666 = vmatpush1.msra.mxu0 0.0
    %1667 = vmatprep.subr.mxu0 0.0
    %1668 = vmatpush1.msra.mxu0 0.0
    %1669 = vmatprep.subr.mxu0 0.0
    %1670 = vmatpush1.msra.mxu0 0.0
    %1671 = vmatprep.subr.mxu0 0.0
    %1672 = vmatpush1.msra.mxu0 0.0
    %1673 = vmatprep.subr.mxu0 0.0
    %1674 = vmatpush1.msra.mxu0 0.0
    %1675 = vmatprep.subr.mxu0 0.0
    %1676 = vmatpush1.msra.mxu0 0.0
    %1677 = vmatprep.subr.mxu0 0.0
    %1678 = vmatpush1.msra.mxu0 0.0
    %1679 = vmatprep.subr.mxu0 0.0
    %1680 = vmatpush1.msra.mxu0 0.0
    %1681 = vmatprep.subr.mxu0 0.0
    %1682 = vmatpush1.msra.mxu0 0.0
    %1683 = vmatprep.subr.mxu0 0.0
    %1684 = vmatpush1.msra.mxu0 0.0
    %1685 = vmatprep.subr.mxu0 0.0
    %1686 = vmatpush1.msra.mxu0 0.0
    %1687 = vmatprep.subr.mxu0 0.0
    %1688 = vmatpush1.msra.mxu0 0.0
    %1689 = vmatprep.subr.mxu0 0.0
    %1690 = vmatpush1.msra.mxu0 0.0
    %1691 = vmatprep.subr.mxu0 0.0
    %1692 = vmatpush1.msra.mxu0 0.0
    %1693 = vmatprep.subr.mxu0 0.0
    %1694 = vmatpush1.msra.mxu0 0.0
    %1695 = vmatprep.subr.mxu0 0.0
    %1696 = vmatpush1.msra.mxu0 0.0
    %1697 = vmatprep.subr.mxu0 0.0
    %1698 = vmatpush1.msra.mxu0 0.0
    %1699 = vmatprep.subr.mxu0 0.0
    %1700 = vmatpush1.msra.mxu0 0.0
    %1701 = vmatprep.subr.mxu0 0.0
    %1702 = vmatpush1.msra.mxu0 0.0
    %1703 = vmatprep.subr.mxu0 0.0
    %1704 = vmatpush1.msra.mxu0 0.0
    %1705 = vmatprep.subr.mxu0 0.0
    %1706 = vmatpush1.msra.mxu0 0.0
    %1707 = vmatprep.subr.mxu0 0.0
    %1708 = vmatpush1.msra.mxu0 0.0
    %1709 = vmatprep.subr.mxu0 0.0
    %1710 = vmatpush1.msra.mxu0 0.0
    %1711 = vmatprep.mubr.f32.mxu0 0.0
    %1712 = vmatmul.mubr.f32.gmra.mrb[0].mxu0 %v1639
    %v1713 = vpop.f32.mrb[0].mxu0
    %v1714 = vadd.f32 %v1636, %v1713
    %v1715 = vpop.f32.mrb[0].mxu0
    %1716 = vmatprep.mubr.f32.mxu0 0.0
    %1717 = vmatmul.mubr.f32.gmra.mrb[0].mxu0 %v1642
    %v1718 = vpop.f32.mrb[0].mxu0
    %v1719 = vadd.f32 %v1636, %v1718
    %v1720 = vpop.f32.mrb[0].mxu0
    %1721 = vdwg.mxu0
    %v1722 = vmax.f32 %v1714, 0.0
    %v1723 = vmax.f32 %v1719, 0.0
    %v1725 = vlaneseq
    %v1726 = vshrl.u32 %v1725, 7
    %v1727 = vsub.s32 0, %v1726
    %v1728 = vrot.slane %v1631, %v1727
    %v1731 = vsel %vm588, %v1722, 0
    %v1734 = vsel %vm588, %v1723, 0
    %1736 = vmatprep.subr.mxu0 0.0
    %1737 = vmatpush1.msra.mxu0 %v1628
    %1738 = vmatprep.subr.mxu0 0.0
    %1739 = vmatpush1.msra.mxu0 %v1629
    %1740 = vmatprep.subr.mxu0 0.0
    %1741 = vmatpush1.msra.mxu0 %v1630
    %1742 = vmatprep.subr.mxu0 0.0
    %1743 = vmatpush1.msra.mxu0 0.0
    %1744 = vmatprep.subr.mxu0 0.0
    %1745 = vmatpush1.msra.mxu0 0.0
    %1746 = vmatprep.subr.mxu0 0.0
    %1747 = vmatpush1.msra.mxu0 0.0
    %1748 = vmatprep.subr.mxu0 0.0
    %1749 = vmatpush1.msra.mxu0 0.0
    %1750 = vmatprep.subr.mxu0 0.0
    %1751 = vmatpush1.msra.mxu0 0.0
    %1752 = vmatprep.subr.mxu0 0.0
    %1753 = vmatpush1.msra.mxu0 0.0
    %1754 = vmatprep.subr.mxu0 0.0
    %1755 = vmatpush1.msra.mxu0 0.0
    %1756 = vmatprep.subr.mxu0 0.0
    %1757 = vmatpush1.msra.mxu0 0.0
    %1758 = vmatprep.subr.mxu0 0.0
    %1759 = vmatpush1.msra.mxu0 0.0
    %1760 = vmatprep.subr.mxu0 0.0
    %1761 = vmatpush1.msra.mxu0 0.0
    %1762 = vmatprep.subr.mxu0 0.0
    %1763 = vmatpush1.msra.mxu0 0.0
    %1764 = vmatprep.subr.mxu0 0.0
    %1765 = vmatpush1.msra.mxu0 0.0
    %1766 = vmatprep.subr.mxu0 0.0
    %1767 = vmatpush1.msra.mxu0 0.0
    %1768 = vmatprep.subr.mxu0 0.0
    %1769 = vmatpush1.msra.mxu0 0.0
    %1770 = vmatprep.subr.mxu0 0.0
    %1771 = vmatpush1.msra.mxu0 0.0
    %1772 = vmatprep.subr.mxu0 0.0
    %1773 = vmatpush1.msra.mxu0 0.0
    %1774 = vmatprep.subr.mxu0 0.0
    %1775 = vmatpush1.msra.mxu0 0.0
    %1776 = vmatprep.subr.mxu0 0.0
    %1777 = vmatpush1.msra.mxu0 0.0
    %1778 = vmatprep.subr.mxu0 0.0
    %1779 = vmatpush1.msra.mxu0 0.0
    %1780 = vmatprep.subr.mxu0 0.0
    %1781 = vmatpush1.msra.mxu0 0.0
    %1782 = vmatprep.subr.mxu0 0.0
    %1783 = vmatpush1.msra.mxu0 0.0
    %1784 = vmatprep.subr.mxu0 0.0
    %1785 = vmatpush1.msra.mxu0 0.0
    %1786 = vmatprep.subr.mxu0 0.0
    %1787 = vmatpush1.msra.mxu0 0.0
    %1788 = vmatprep.subr.mxu0 0.0
    %1789 = vmatpush1.msra.mxu0 0.0
    %1790 = vmatprep.subr.mxu0 0.0
    %1791 = vmatpush1.msra.mxu0 0.0
    %1792 = vmatprep.subr.mxu0 0.0
    %1793 = vmatpush1.msra.mxu0 0.0
    %1794 = vmatprep.subr.mxu0 0.0
    %1795 = vmatpush1.msra.mxu0 0.0
    %1796 = vmatprep.subr.mxu0 0.0
    %1797 = vmatpush1.msra.mxu0 0.0
    %1798 = vmatprep.subr.mxu0 0.0
    %1799 = vmatpush1.msra.mxu0 0.0
    %1800 = vmatprep.mubr.f32.mxu0 0.0
    %1801 = vmatmul.mubr.f32.gmra.mrb[0].mxu0 %v1731
    %v1802 = vpop.f32.mrb[0].mxu0
    %v1803 = vadd.f32 %v1728, %v1802
    %v1804 = vpop.f32.mrb[0].mxu0
    %1805 = vmatprep.mubr.f32.mxu0 0.0
    %1806 = vmatmul.mubr.f32.gmra.mrb[0].mxu0 %v1734
    %v1807 = vpop.f32.mrb[0].mxu0
    %v1808 = vadd.f32 %v1728, %v1807
    %v1809 = vpop.f32.mrb[0].mxu0
    %1810 = vdwg.mxu0
    %vm1811 = vcmask 7168
    %1812 = vst.msk [vmem:[%s143] sm:$0xff] %vm1811, %v1803
    %vm1813 = vcmask 1024
    %1814 = vst.msk [vmem:[%s143 + $0x8] sm:$0x3] %vm1813, %v1808
    // Predicated region
    $region346: #{dehnn_forward.1} parent=1 // pred_check
      _
    $region347: #{dehnn_forward.1} parent=1 // pred_check_branch
      %1816 = sbr.rel (0) target = $region349
    $region348: #{dehnn_forward.1} parent=1 // pred_region
      _
    $region349: #{dehnn_forward.1} parent=1 // pred_fallthru
      _
    // Predicated region
    $region350: #{dehnn_forward.1} parent=1 // pred_check
      _
    $region351: #{dehnn_forward.1} parent=1 // pred_check_branch
      %1818 = sbr.rel (0) target = $region353
    $region352: #{dehnn_forward.1} parent=1 // pred_region
      _
    $region353: #{dehnn_forward.1} parent=1 // pred_fallthru
      _
    %1819 = vsyncpa [#allocation4], 1
    %1820 = vsyncpa [#allocation6], 1
    %1821 = vsyncpa [#allocation9], 1
    %1822 = vsyncpa [#allocation12], 1
    %1823 = vsyncpa [#allocation15], 1
    %1824 = vsyncpa [#allocation18], 1
    %1825 = vsyncpa [#allocation21], 1
    %1826 = vsyncpa [#allocation24], 1

</llo_original>
